<compile_context>
chip_gen: v5e
topology: v5e:2x2
jax: 0.10.0
libtpu: 0.0.40
codegen_flags: <defaults>
</compile_context>

<pallas_src>
import functools

import jax
import jax.numpy as jnp
from jax.experimental import pallas as pl
from jax.experimental.pallas import tpu as pltpu


# ----------------------------------------------------------------------------
# Fused kernel: all layers + time recurrence + FC head, everything VMEM-resident.
# ----------------------------------------------------------------------------
def _make_fused_lstm_kernel(num_layers, B, T, H):
    G = 4 * H

    def kernel(*refs):
        # ---- unpack refs ----------------------------------------------------
        idx = 0
        x_ref = refs[idx]; idx += 1              # (T*B, F)   time-major rows
        wih0_ref = refs[idx]; idx += 1           # (F, 4H)
        whh0_ref = refs[idx]; idx += 1           # (H, 4H)
        b0_ref = refs[idx]; idx += 1             # (1, 4H)
        deep_refs = []                           # layers >= 1: (W_ih^T, W_hh^T, b)
        for _ in range(num_layers - 1):
            deep_refs.append((refs[idx], refs[idx + 1], refs[idx + 2]))
            idx += 3
        fcw_ref = refs[idx]; idx += 1            # (H, O)
        fcb_ref = refs[idx]; idx += 1            # (1, O)
        out_ref = refs[idx]                      # (B, O)

        # ---- hoisted constants (outside all loops) ---------------------------
        # Lane mask selecting the 'g' gate block [2H, 3H) inside the (B, 4H) vreg.
        lane = jax.lax.broadcasted_iota(jnp.int32, (B, G), 1)
        is_g = jnp.logical_and(lane >= 2 * H, lane < 3 * H)

        def lstm_cell(gates, c):
            # Whole-vreg nonlinearities on the EUP, then one select + 4 slices.
            sig = jax.nn.sigmoid(gates)
            tnh = jnp.tanh(gates)
            acts = jnp.where(is_g, tnh, sig)     # [i, f, g, o] with g -> tanh
            i_g = acts[:, 0 * H:1 * H]
            f_g = acts[:, 1 * H:2 * H]
            g_g = acts[:, 2 * H:3 * H]
            o_g = acts[:, 3 * H:4 * H]
            c_new = f_g * c + i_g * g_g
            h_new = o_g * jnp.tanh(c_new)
            return h_new, c_new

        # ---- layer-0 input projection for all timesteps (one MXU pass) -------
        # Rows are time-major: row t*B + b  <->  (timestep t, batch b).
        gx0 = (
            jnp.dot(x_ref[...], wih0_ref[...], preferred_element_type=jnp.float32)
            + b0_ref[...]
        )                                         # (T*B, 4H)
        whh0 = whh0_ref[...]

        # Deep-layer weights loaded once; bias broadcast hoisted out of the loop.
        deep = [
            (w_ih[...], w_hh[...], jnp.broadcast_to(b[...], (B, G)))
            for (w_ih, w_hh, b) in deep_refs
        ]

        h = [jnp.zeros((B, H), jnp.float32) for _ in range(num_layers)]
        c = [jnp.zeros((B, H), jnp.float32) for _ in range(num_layers)]

        # ---- fully-unrolled time recurrence (static T) ------------------------
        # All layers advance each step; h/c stay in vregs/VMEM, zero HBM traffic.
        for t in range(T):
            gates0 = gx0[t * B:(t + 1) * B, :] + jnp.dot(
                h[0], whh0, preferred_element_type=jnp.float32)
            h[0], c[0] = lstm_cell(gates0, c[0])
            for l in range(1, num_layers):
                w_ih, w_hh, b_b = deep[l - 1]
                # Two aligned (B,H)@(H,4H) MXU passes; inputs are tiny so MXU issue
                # is not the bottleneck and this avoids an unaligned lane concat.
                gates = (
                    jnp.dot(h[l - 1], w_ih, preferred_element_type=jnp.float32)
                    + jnp.dot(h[l], w_hh, preferred_element_type=jnp.float32)
                    + b_b
                )
                h[l], c[l] = lstm_cell(gates, c[l])

        # ---- fused FC head on the final hidden state (single small store) -----
        out_ref[...] = (
            jnp.dot(h[num_layers - 1], fcw_ref[...],
                    preferred_element_type=jnp.float32)
            + fcb_ref[...]
        )

    return kernel


# ----------------------------------------------------------------------------
# Full model forward (mirrors LSTM.forward in the PyTorch module).
# ----------------------------------------------------------------------------
@jax.jit
def lstm_model_forward(x, lstm_params, fc_w_t, fc_b):
    """x: (B, T, F) batch-first. lstm_params: tuple of (W_ih^T, W_hh^T, bias(1,4H))."""
    B, T, F = x.shape
    num_layers = len(lstm_params)
    H = lstm_params[0][1].shape[0]
    O = fc_w_t.shape[1]

    # Wrapper-side layout plumbing (one-time, tiny): time-major flatten so the
    # kernel does the whole-sequence layer-0 input projection as a single matmul.
    x_flat = jnp.swapaxes(x, 0, 1).reshape(T * B, F)

    inputs = [x_flat]
    wih0_t, whh0_t, b0 = lstm_params[0]
    inputs += [wih0_t, whh0_t, b0]
    for (wih_t, whh_t, b) in lstm_params[1:]:
        inputs += [wih_t, whh_t, b]
    inputs += [fc_w_t, fc_b]

    vmem = pl.BlockSpec(memory_space=pltpu.MemorySpace.VMEM)
    kernel = _make_fused_lstm_kernel(num_layers, B, T, H)

    # No grid: single kernel invocation, everything resident in VMEM.
    return pl.pallas_call(
        kernel,
        out_shape=jax.ShapeDtypeStruct((B, O), jnp.float32),
        in_specs=[vmem] * len(inputs),
        out_specs=vmem,
        compiler_params=pltpu.CompilerParams(
            vmem_limit_bytes=64 * 1024 * 1024,   # fits v7x's 64 MiB budget too
        ),
    )(*inputs)


# ----------------------------------------------------------------------------
# Pure-JAX reference for validation.
# ----------------------------------------------------------------------------
def lstm_model_reference(x, lstm_params, fc_w_t, fc_b):
    out = x
    for (wih_t, whh_t, bias) in lstm_params:
        B = out.shape[0]
        H = whh_t.shape[0]
        h = jnp.zeros((B, H), jnp.float32)
        c = jnp.zeros((B, H), jnp.float32)

        def step(carry, x_t):
            h, c = carry
            gates = x_t @ wih_t + h @ whh_t + bias[0]
            i = jax.nn.sigmoid(gates[:, 0 * H:1 * H])
            f = jax.nn.sigmoid(gates[:, 1 * H:2 * H])
            g = jnp.tanh(gates[:, 2 * H:3 * H])
            o = jax.nn.sigmoid(gates[:, 3 * H:4 * H])
            c = f * c + i * g
            h = o * jnp.tanh(c)
            return (h, c), h

        (_, _), hs = jax.lax.scan(step, (h, c), jnp.swapaxes(out, 0, 1))
        out = jnp.swapaxes(hs, 0, 1)
    return out[:, -1, :] @ fc_w_t + fc_b[0]


if __name__ == "__main__":
    # Small shapes consistent with the module's forward.
    B, T = 2, 8            # batch, seq_length
    F = 4                  # features (input_size)
    H = 32                 # hidden_size
    O = 3                  # output_size (num_classes)
    L = 2                  # num_layers

    key = jax.random.PRNGKey(0)
    keys = jax.random.split(key, 2 + 4 * L)

    x = jax.random.normal(keys[0], (B, T, F), dtype=jnp.float32)

    # Deterministic parameter init (synthetic; PyTorch gate order i,f,g,o).
    scale = 0.1
    lstm_params = []
    for layer in range(L):
        f_in = F if layer == 0 else H
        k = keys[2 + 4 * layer: 2 + 4 * (layer + 1)]
        wih_t = scale * jax.random.normal(k[0], (f_in, 4 * H), dtype=jnp.float32)
        whh_t = scale * jax.random.normal(k[1], (H, 4 * H), dtype=jnp.float32)
        b_ih = scale * jax.random.normal(k[2], (4 * H,), dtype=jnp.float32)
        b_hh = scale * jax.random.normal(k[3], (4 * H,), dtype=jnp.float32)
        bias = (b_ih + b_hh).reshape(1, 4 * H)
        lstm_params.append((wih_t, whh_t, bias))
    lstm_params = tuple(lstm_params)

    fc_w_t = scale * jax.random.normal(keys[1], (H, O), dtype=jnp.float32)
    fc_b = (scale * jax.random.normal(jax.random.PRNGKey(1), (O,),
                                      dtype=jnp.float32)).reshape(1, O)

    out = lstm_model_forward(x, lstm_params, fc_w_t, fc_b)
    out = jax.block_until_ready(out)

    ref = lstm_model_reference(x, lstm_params, fc_w_t, fc_b)
    assert out.shape == (B, O), out.shape
    assert jnp.allclose(out, ref, rtol=1e-4, atol=1e-4), (out, ref)

    print("KERNEL_OK")
</pallas_src>

<mosaic_0001>
module attributes {stable_mosaic.version = 11 : i64} {
  func.func @kernel(%arg0: memref<16x4xf32, #tpu.memory_space<vmem>>, %arg1: memref<4x128xf32, #tpu.memory_space<vmem>>, %arg2: memref<32x128xf32, #tpu.memory_space<vmem>>, %arg3: memref<1x128xf32, #tpu.memory_space<vmem>>, %arg4: memref<32x128xf32, #tpu.memory_space<vmem>>, %arg5: memref<32x128xf32, #tpu.memory_space<vmem>>, %arg6: memref<1x128xf32, #tpu.memory_space<vmem>>, %arg7: memref<32x3xf32, #tpu.memory_space<vmem>>, %arg8: memref<1x3xf32, #tpu.memory_space<vmem>>, %arg9: memref<2x3xf32, #tpu.memory_space<vmem>>) attributes {dimension_semantics = [], scalar_prefetch = 0 : i64, scratch_operands = 0 : i64, tpu.core_type = #tpu.core_type<tc>} {
    %0 = tpu.iota {dimensions = array<i32: 1>} : vector<2x128xi32>
    %c64_i32 = arith.constant 64 : i32
    %1 = vector.broadcast %c64_i32 : i32 to vector<2x128xi32>
    %2 = arith.cmpi sge, %0, %1 : vector<2x128xi32>
    %c96_i32 = arith.constant 96 : i32
    %3 = vector.broadcast %c96_i32 : i32 to vector<2x128xi32>
    %4 = arith.cmpi slt, %0, %3 : vector<2x128xi32>
    %5 = arith.andi %2, %4 : vector<2x128xi1>
    %c0 = arith.constant 0 : index
    %c0_0 = arith.constant 0 : index
    %6 = vector.load %arg0[%c0, %c0_0] : memref<16x4xf32, #tpu.memory_space<vmem>>, vector<16x4xf32>
    %c0_1 = arith.constant 0 : index
    %c0_2 = arith.constant 0 : index
    %7 = vector.load %arg1[%c0_1, %c0_2] : memref<4x128xf32, #tpu.memory_space<vmem>>, vector<4x128xf32>
    %cst = arith.constant dense<0.000000e+00> : vector<16x128xf32>
    %8 = tpu.matmul %6, %7, %cst {dimension_numbers = #tpu.dot_dimension_numbers<[1], [0], [0], [1], [0, 0, 1, 1], [], []>} : vector<16x4xf32>, vector<4x128xf32>, vector<16x128xf32> -> vector<16x128xf32>
    %c0_3 = arith.constant 0 : index
    %c0_4 = arith.constant 0 : index
    %9 = vector.load %arg3[%c0_3, %c0_4] : memref<1x128xf32, #tpu.memory_space<vmem>>, vector<1x128xf32>
    %10 = vector.broadcast %9 : vector<1x128xf32> to vector<16x128xf32>
    %11 = arith.addf %8, %10 : vector<16x128xf32>
    %c0_5 = arith.constant 0 : index
    %c0_6 = arith.constant 0 : index
    %12 = vector.load %arg2[%c0_5, %c0_6] : memref<32x128xf32, #tpu.memory_space<vmem>>, vector<32x128xf32>
    %c0_7 = arith.constant 0 : index
    %c0_8 = arith.constant 0 : index
    %13 = vector.load %arg4[%c0_7, %c0_8] : memref<32x128xf32, #tpu.memory_space<vmem>>, vector<32x128xf32>
    %c0_9 = arith.constant 0 : index
    %c0_10 = arith.constant 0 : index
    %14 = vector.load %arg5[%c0_9, %c0_10] : memref<32x128xf32, #tpu.memory_space<vmem>>, vector<32x128xf32>
    %c0_11 = arith.constant 0 : index
    %c0_12 = arith.constant 0 : index
    %15 = vector.load %arg6[%c0_11, %c0_12] : memref<1x128xf32, #tpu.memory_space<vmem>>, vector<1x128xf32>
    %16 = vector.shape_cast %15 : vector<1x128xf32> to vector<1x128xf32>
    %17 = vector.broadcast %16 : vector<1x128xf32> to vector<2x128xf32>
    %cst_13 = arith.constant 0.000000e+00 : f32
    %18 = vector.broadcast %cst_13 : f32 to vector<2x32xf32>
    %cst_14 = arith.constant 0.000000e+00 : f32
    %19 = vector.broadcast %cst_14 : f32 to vector<2x32xf32>
    %cst_15 = arith.constant 0.000000e+00 : f32
    %20 = vector.broadcast %cst_15 : f32 to vector<2x32xf32>
    %cst_16 = arith.constant 0.000000e+00 : f32
    %21 = vector.broadcast %cst_16 : f32 to vector<2x32xf32>
    %22 = vector.extract_strided_slice %11 {offsets = [0, 0], sizes = [2, 128], strides = [1, 1]} : vector<16x128xf32> to vector<2x128xf32>
    %cst_17 = arith.constant dense<0.000000e+00> : vector<2x128xf32>
    %23 = tpu.matmul %18, %12, %cst_17 {dimension_numbers = #tpu.dot_dimension_numbers<[1], [0], [0], [1], [0, 0, 1, 1], [], []>} : vector<2x32xf32>, vector<32x128xf32>, vector<2x128xf32> -> vector<2x128xf32>
    %24 = arith.addf %22, %23 : vector<2x128xf32>
    %25 = arith.negf %24 : vector<2x128xf32>
    %26 = math.exp %25 : vector<2x128xf32>
    %cst_18 = arith.constant 1.000000e+00 : f32
    %27 = vector.broadcast %cst_18 : f32 to vector<2x128xf32>
    %28 = arith.addf %27, %26 : vector<2x128xf32>
    %29 = arith.divf %27, %28 : vector<2x128xf32>
    %30 = math.tanh %24 : vector<2x128xf32>
    %31 = arith.select %5, %30, %29 : vector<2x128xi1>, vector<2x128xf32>
    %32 = vector.extract_strided_slice %31 {offsets = [0, 0], sizes = [2, 32], strides = [1, 1]} : vector<2x128xf32> to vector<2x32xf32>
    %33 = vector.extract_strided_slice %31 {offsets = [0, 32], sizes = [2, 32], strides = [1, 1]} : vector<2x128xf32> to vector<2x32xf32>
    %34 = vector.extract_strided_slice %31 {offsets = [0, 64], sizes = [2, 32], strides = [1, 1]} : vector<2x128xf32> to vector<2x32xf32>
    %35 = vector.extract_strided_slice %31 {offsets = [0, 96], sizes = [2, 32], strides = [1, 1]} : vector<2x128xf32> to vector<2x32xf32>
    %36 = arith.mulf %33, %20 : vector<2x32xf32>
    %37 = arith.mulf %32, %34 : vector<2x32xf32>
    %38 = arith.addf %36, %37 : vector<2x32xf32>
    %39 = math.tanh %38 : vector<2x32xf32>
    %40 = arith.mulf %35, %39 : vector<2x32xf32>
    %cst_19 = arith.constant dense<0.000000e+00> : vector<2x128xf32>
    %41 = tpu.matmul %40, %13, %cst_19 {dimension_numbers = #tpu.dot_dimension_numbers<[1], [0], [0], [1], [0, 0, 1, 1], [], []>} : vector<2x32xf32>, vector<32x128xf32>, vector<2x128xf32> -> vector<2x128xf32>
    %cst_20 = arith.constant dense<0.000000e+00> : vector<2x128xf32>
    %42 = tpu.matmul %19, %14, %cst_20 {dimension_numbers = #tpu.dot_dimension_numbers<[1], [0], [0], [1], [0, 0, 1, 1], [], []>} : vector<2x32xf32>, vector<32x128xf32>, vector<2x128xf32> -> vector<2x128xf32>
    %43 = arith.addf %41, %42 : vector<2x128xf32>
    %44 = arith.addf %43, %17 : vector<2x128xf32>
    %45 = arith.negf %44 : vector<2x128xf32>
    %46 = math.exp %45 : vector<2x128xf32>
    %cst_21 = arith.constant 1.000000e+00 : f32
    %47 = vector.broadcast %cst_21 : f32 to vector<2x128xf32>
    %48 = arith.addf %47, %46 : vector<2x128xf32>
    %49 = arith.divf %47, %48 : vector<2x128xf32>
    %50 = math.tanh %44 : vector<2x128xf32>
    %51 = arith.select %5, %50, %49 : vector<2x128xi1>, vector<2x128xf32>
    %52 = vector.extract_strided_slice %51 {offsets = [0, 0], sizes = [2, 32], strides = [1, 1]} : vector<2x128xf32> to vector<2x32xf32>
    %53 = vector.extract_strided_slice %51 {offsets = [0, 32], sizes = [2, 32], strides = [1, 1]} : vector<2x128xf32> to vector<2x32xf32>
    %54 = vector.extract_strided_slice %51 {offsets = [0, 64], sizes = [2, 32], strides = [1, 1]} : vector<2x128xf32> to vector<2x32xf32>
    %55 = vector.extract_strided_slice %51 {offsets = [0, 96], sizes = [2, 32], strides = [1, 1]} : vector<2x128xf32> to vector<2x32xf32>
    %56 = arith.mulf %53, %21 : vector<2x32xf32>
    %57 = arith.mulf %52, %54 : vector<2x32xf32>
    %58 = arith.addf %56, %57 : vector<2x32xf32>
    %59 = math.tanh %58 : vector<2x32xf32>
    %60 = arith.mulf %55, %59 : vector<2x32xf32>
    %61 = vector.extract_strided_slice %11 {offsets = [2, 0], sizes = [2, 128], strides = [1, 1]} : vector<16x128xf32> to vector<2x128xf32>
    %cst_22 = arith.constant dense<0.000000e+00> : vector<2x128xf32>
    %62 = tpu.matmul %40, %12, %cst_22 {dimension_numbers = #tpu.dot_dimension_numbers<[1], [0], [0], [1], [0, 0, 1, 1], [], []>} : vector<2x32xf32>, vector<32x128xf32>, vector<2x128xf32> -> vector<2x128xf32>
    %63 = arith.addf %61, %62 : vector<2x128xf32>
    %64 = arith.negf %63 : vector<2x128xf32>
    %65 = math.exp %64 : vector<2x128xf32>
    %cst_23 = arith.constant 1.000000e+00 : f32
    %66 = vector.broadcast %cst_23 : f32 to vector<2x128xf32>
    %67 = arith.addf %66, %65 : vector<2x128xf32>
    %68 = arith.divf %66, %67 : vector<2x128xf32>
    %69 = math.tanh %63 : vector<2x128xf32>
    %70 = arith.select %5, %69, %68 : vector<2x128xi1>, vector<2x128xf32>
    %71 = vector.extract_strided_slice %70 {offsets = [0, 0], sizes = [2, 32], strides = [1, 1]} : vector<2x128xf32> to vector<2x32xf32>
    %72 = vector.extract_strided_slice %70 {offsets = [0, 32], sizes = [2, 32], strides = [1, 1]} : vector<2x128xf32> to vector<2x32xf32>
    %73 = vector.extract_strided_slice %70 {offsets = [0, 64], sizes = [2, 32], strides = [1, 1]} : vector<2x128xf32> to vector<2x32xf32>
    %74 = vector.extract_strided_slice %70 {offsets = [0, 96], sizes = [2, 32], strides = [1, 1]} : vector<2x128xf32> to vector<2x32xf32>
    %75 = arith.mulf %72, %38 : vector<2x32xf32>
    %76 = arith.mulf %71, %73 : vector<2x32xf32>
    %77 = arith.addf %75, %76 : vector<2x32xf32>
    %78 = math.tanh %77 : vector<2x32xf32>
    %79 = arith.mulf %74, %78 : vector<2x32xf32>
    %cst_24 = arith.constant dense<0.000000e+00> : vector<2x128xf32>
    %80 = tpu.matmul %79, %13, %cst_24 {dimension_numbers = #tpu.dot_dimension_numbers<[1], [0], [0], [1], [0, 0, 1, 1], [], []>} : vector<2x32xf32>, vector<32x128xf32>, vector<2x128xf32> -> vector<2x128xf32>
    %cst_25 = arith.constant dense<0.000000e+00> : vector<2x128xf32>
    %81 = tpu.matmul %60, %14, %cst_25 {dimension_numbers = #tpu.dot_dimension_numbers<[1], [0], [0], [1], [0, 0, 1, 1], [], []>} : vector<2x32xf32>, vector<32x128xf32>, vector<2x128xf32> -> vector<2x128xf32>
    %82 = arith.addf %80, %81 : vector<2x128xf32>
    %83 = arith.addf %82, %17 : vector<2x128xf32>
    %84 = arith.negf %83 : vector<2x128xf32>
    %85 = math.exp %84 : vector<2x128xf32>
    %cst_26 = arith.constant 1.000000e+00 : f32
    %86 = vector.broadcast %cst_26 : f32 to vector<2x128xf32>
    %87 = arith.addf %86, %85 : vector<2x128xf32>
    %88 = arith.divf %86, %87 : vector<2x128xf32>
    %89 = math.tanh %83 : vector<2x128xf32>
    %90 = arith.select %5, %89, %88 : vector<2x128xi1>, vector<2x128xf32>
    %91 = vector.extract_strided_slice %90 {offsets = [0, 0], sizes = [2, 32], strides = [1, 1]} : vector<2x128xf32> to vector<2x32xf32>
    %92 = vector.extract_strided_slice %90 {offsets = [0, 32], sizes = [2, 32], strides = [1, 1]} : vector<2x128xf32> to vector<2x32xf32>
    %93 = vector.extract_strided_slice %90 {offsets = [0, 64], sizes = [2, 32], strides = [1, 1]} : vector<2x128xf32> to vector<2x32xf32>
    %94 = vector.extract_strided_slice %90 {offsets = [0, 96], sizes = [2, 32], strides = [1, 1]} : vector<2x128xf32> to vector<2x32xf32>
    %95 = arith.mulf %92, %58 : vector<2x32xf32>
    %96 = arith.mulf %91, %93 : vector<2x32xf32>
    %97 = arith.addf %95, %96 : vector<2x32xf32>
    %98 = math.tanh %97 : vector<2x32xf32>
    %99 = arith.mulf %94, %98 : vector<2x32xf32>
    %100 = vector.extract_strided_slice %11 {offsets = [4, 0], sizes = [2, 128], strides = [1, 1]} : vector<16x128xf32> to vector<2x128xf32>
    %cst_27 = arith.constant dense<0.000000e+00> : vector<2x128xf32>
    %101 = tpu.matmul %79, %12, %cst_27 {dimension_numbers = #tpu.dot_dimension_numbers<[1], [0], [0], [1], [0, 0, 1, 1], [], []>} : vector<2x32xf32>, vector<32x128xf32>, vector<2x128xf32> -> vector<2x128xf32>
    %102 = arith.addf %100, %101 : vector<2x128xf32>
    %103 = arith.negf %102 : vector<2x128xf32>
    %104 = math.exp %103 : vector<2x128xf32>
    %cst_28 = arith.constant 1.000000e+00 : f32
    %105 = vector.broadcast %cst_28 : f32 to vector<2x128xf32>
    %106 = arith.addf %105, %104 : vector<2x128xf32>
    %107 = arith.divf %105, %106 : vector<2x128xf32>
    %108 = math.tanh %102 : vector<2x128xf32>
    %109 = arith.select %5, %108, %107 : vector<2x128xi1>, vector<2x128xf32>
    %110 = vector.extract_strided_slice %109 {offsets = [0, 0], sizes = [2, 32], strides = [1, 1]} : vector<2x128xf32> to vector<2x32xf32>
    %111 = vector.extract_strided_slice %109 {offsets = [0, 32], sizes = [2, 32], strides = [1, 1]} : vector<2x128xf32> to vector<2x32xf32>
    %112 = vector.extract_strided_slice %109 {offsets = [0, 64], sizes = [2, 32], strides = [1, 1]} : vector<2x128xf32> to vector<2x32xf32>
    %113 = vector.extract_strided_slice %109 {offsets = [0, 96], sizes = [2, 32], strides = [1, 1]} : vector<2x128xf32> to vector<2x32xf32>
    %114 = arith.mulf %111, %77 : vector<2x32xf32>
    %115 = arith.mulf %110, %112 : vector<2x32xf32>
    %116 = arith.addf %114, %115 : vector<2x32xf32>
    %117 = math.tanh %116 : vector<2x32xf32>
    %118 = arith.mulf %113, %117 : vector<2x32xf32>
    %cst_29 = arith.constant dense<0.000000e+00> : vector<2x128xf32>
    %119 = tpu.matmul %118, %13, %cst_29 {dimension_numbers = #tpu.dot_dimension_numbers<[1], [0], [0], [1], [0, 0, 1, 1], [], []>} : vector<2x32xf32>, vector<32x128xf32>, vector<2x128xf32> -> vector<2x128xf32>
    %cst_30 = arith.constant dense<0.000000e+00> : vector<2x128xf32>
    %120 = tpu.matmul %99, %14, %cst_30 {dimension_numbers = #tpu.dot_dimension_numbers<[1], [0], [0], [1], [0, 0, 1, 1], [], []>} : vector<2x32xf32>, vector<32x128xf32>, vector<2x128xf32> -> vector<2x128xf32>
    %121 = arith.addf %119, %120 : vector<2x128xf32>
    %122 = arith.addf %121, %17 : vector<2x128xf32>
    %123 = arith.negf %122 : vector<2x128xf32>
    %124 = math.exp %123 : vector<2x128xf32>
    %cst_31 = arith.constant 1.000000e+00 : f32
    %125 = vector.broadcast %cst_31 : f32 to vector<2x128xf32>
    %126 = arith.addf %125, %124 : vector<2x128xf32>
    %127 = arith.divf %125, %126 : vector<2x128xf32>
    %128 = math.tanh %122 : vector<2x128xf32>
    %129 = arith.select %5, %128, %127 : vector<2x128xi1>, vector<2x128xf32>
    %130 = vector.extract_strided_slice %129 {offsets = [0, 0], sizes = [2, 32], strides = [1, 1]} : vector<2x128xf32> to vector<2x32xf32>
    %131 = vector.extract_strided_slice %129 {offsets = [0, 32], sizes = [2, 32], strides = [1, 1]} : vector<2x128xf32> to vector<2x32xf32>
    %132 = vector.extract_strided_slice %129 {offsets = [0, 64], sizes = [2, 32], strides = [1, 1]} : vector<2x128xf32> to vector<2x32xf32>
    %133 = vector.extract_strided_slice %129 {offsets = [0, 96], sizes = [2, 32], strides = [1, 1]} : vector<2x128xf32> to vector<2x32xf32>
    %134 = arith.mulf %131, %97 : vector<2x32xf32>
    %135 = arith.mulf %130, %132 : vector<2x32xf32>
    %136 = arith.addf %134, %135 : vector<2x32xf32>
    %137 = math.tanh %136 : vector<2x32xf32>
    %138 = arith.mulf %133, %137 : vector<2x32xf32>
    %139 = vector.extract_strided_slice %11 {offsets = [6, 0], sizes = [2, 128], strides = [1, 1]} : vector<16x128xf32> to vector<2x128xf32>
    %cst_32 = arith.constant dense<0.000000e+00> : vector<2x128xf32>
    %140 = tpu.matmul %118, %12, %cst_32 {dimension_numbers = #tpu.dot_dimension_numbers<[1], [0], [0], [1], [0, 0, 1, 1], [], []>} : vector<2x32xf32>, vector<32x128xf32>, vector<2x128xf32> -> vector<2x128xf32>
    %141 = arith.addf %139, %140 : vector<2x128xf32>
    %142 = arith.negf %141 : vector<2x128xf32>
    %143 = math.exp %142 : vector<2x128xf32>
    %cst_33 = arith.constant 1.000000e+00 : f32
    %144 = vector.broadcast %cst_33 : f32 to vector<2x128xf32>
    %145 = arith.addf %144, %143 : vector<2x128xf32>
    %146 = arith.divf %144, %145 : vector<2x128xf32>
    %147 = math.tanh %141 : vector<2x128xf32>
    %148 = arith.select %5, %147, %146 : vector<2x128xi1>, vector<2x128xf32>
    %149 = vector.extract_strided_slice %148 {offsets = [0, 0], sizes = [2, 32], strides = [1, 1]} : vector<2x128xf32> to vector<2x32xf32>
    %150 = vector.extract_strided_slice %148 {offsets = [0, 32], sizes = [2, 32], strides = [1, 1]} : vector<2x128xf32> to vector<2x32xf32>
    %151 = vector.extract_strided_slice %148 {offsets = [0, 64], sizes = [2, 32], strides = [1, 1]} : vector<2x128xf32> to vector<2x32xf32>
    %152 = vector.extract_strided_slice %148 {offsets = [0, 96], sizes = [2, 32], strides = [1, 1]} : vector<2x128xf32> to vector<2x32xf32>
    %153 = arith.mulf %150, %116 : vector<2x32xf32>
    %154 = arith.mulf %149, %151 : vector<2x32xf32>
    %155 = arith.addf %153, %154 : vector<2x32xf32>
    %156 = math.tanh %155 : vector<2x32xf32>
    %157 = arith.mulf %152, %156 : vector<2x32xf32>
    %cst_34 = arith.constant dense<0.000000e+00> : vector<2x128xf32>
    %158 = tpu.matmul %157, %13, %cst_34 {dimension_numbers = #tpu.dot_dimension_numbers<[1], [0], [0], [1], [0, 0, 1, 1], [], []>} : vector<2x32xf32>, vector<32x128xf32>, vector<2x128xf32> -> vector<2x128xf32>
    %cst_35 = arith.constant dense<0.000000e+00> : vector<2x128xf32>
    %159 = tpu.matmul %138, %14, %cst_35 {dimension_numbers = #tpu.dot_dimension_numbers<[1], [0], [0], [1], [0, 0, 1, 1], [], []>} : vector<2x32xf32>, vector<32x128xf32>, vector<2x128xf32> -> vector<2x128xf32>
    %160 = arith.addf %158, %159 : vector<2x128xf32>
    %161 = arith.addf %160, %17 : vector<2x128xf32>
    %162 = arith.negf %161 : vector<2x128xf32>
    %163 = math.exp %162 : vector<2x128xf32>
    %cst_36 = arith.constant 1.000000e+00 : f32
    %164 = vector.broadcast %cst_36 : f32 to vector<2x128xf32>
    %165 = arith.addf %164, %163 : vector<2x128xf32>
    %166 = arith.divf %164, %165 : vector<2x128xf32>
    %167 = math.tanh %161 : vector<2x128xf32>
    %168 = arith.select %5, %167, %166 : vector<2x128xi1>, vector<2x128xf32>
    %169 = vector.extract_strided_slice %168 {offsets = [0, 0], sizes = [2, 32], strides = [1, 1]} : vector<2x128xf32> to vector<2x32xf32>
    %170 = vector.extract_strided_slice %168 {offsets = [0, 32], sizes = [2, 32], strides = [1, 1]} : vector<2x128xf32> to vector<2x32xf32>
    %171 = vector.extract_strided_slice %168 {offsets = [0, 64], sizes = [2, 32], strides = [1, 1]} : vector<2x128xf32> to vector<2x32xf32>
    %172 = vector.extract_strided_slice %168 {offsets = [0, 96], sizes = [2, 32], strides = [1, 1]} : vector<2x128xf32> to vector<2x32xf32>
    %173 = arith.mulf %170, %136 : vector<2x32xf32>
    %174 = arith.mulf %169, %171 : vector<2x32xf32>
    %175 = arith.addf %173, %174 : vector<2x32xf32>
    %176 = math.tanh %175 : vector<2x32xf32>
    %177 = arith.mulf %172, %176 : vector<2x32xf32>
    %178 = vector.extract_strided_slice %11 {offsets = [8, 0], sizes = [2, 128], strides = [1, 1]} : vector<16x128xf32> to vector<2x128xf32>
    %cst_37 = arith.constant dense<0.000000e+00> : vector<2x128xf32>
    %179 = tpu.matmul %157, %12, %cst_37 {dimension_numbers = #tpu.dot_dimension_numbers<[1], [0], [0], [1], [0, 0, 1, 1], [], []>} : vector<2x32xf32>, vector<32x128xf32>, vector<2x128xf32> -> vector<2x128xf32>
    %180 = arith.addf %178, %179 : vector<2x128xf32>
    %181 = arith.negf %180 : vector<2x128xf32>
    %182 = math.exp %181 : vector<2x128xf32>
    %cst_38 = arith.constant 1.000000e+00 : f32
    %183 = vector.broadcast %cst_38 : f32 to vector<2x128xf32>
    %184 = arith.addf %183, %182 : vector<2x128xf32>
    %185 = arith.divf %183, %184 : vector<2x128xf32>
    %186 = math.tanh %180 : vector<2x128xf32>
    %187 = arith.select %5, %186, %185 : vector<2x128xi1>, vector<2x128xf32>
    %188 = vector.extract_strided_slice %187 {offsets = [0, 0], sizes = [2, 32], strides = [1, 1]} : vector<2x128xf32> to vector<2x32xf32>
    %189 = vector.extract_strided_slice %187 {offsets = [0, 32], sizes = [2, 32], strides = [1, 1]} : vector<2x128xf32> to vector<2x32xf32>
    %190 = vector.extract_strided_slice %187 {offsets = [0, 64], sizes = [2, 32], strides = [1, 1]} : vector<2x128xf32> to vector<2x32xf32>
    %191 = vector.extract_strided_slice %187 {offsets = [0, 96], sizes = [2, 32], strides = [1, 1]} : vector<2x128xf32> to vector<2x32xf32>
    %192 = arith.mulf %189, %155 : vector<2x32xf32>
    %193 = arith.mulf %188, %190 : vector<2x32xf32>
    %194 = arith.addf %192, %193 : vector<2x32xf32>
    %195 = math.tanh %194 : vector<2x32xf32>
    %196 = arith.mulf %191, %195 : vector<2x32xf32>
    %cst_39 = arith.constant dense<0.000000e+00> : vector<2x128xf32>
    %197 = tpu.matmul %196, %13, %cst_39 {dimension_numbers = #tpu.dot_dimension_numbers<[1], [0], [0], [1], [0, 0, 1, 1], [], []>} : vector<2x32xf32>, vector<32x128xf32>, vector<2x128xf32> -> vector<2x128xf32>
    %cst_40 = arith.constant dense<0.000000e+00> : vector<2x128xf32>
    %198 = tpu.matmul %177, %14, %cst_40 {dimension_numbers = #tpu.dot_dimension_numbers<[1], [0], [0], [1], [0, 0, 1, 1], [], []>} : vector<2x32xf32>, vector<32x128xf32>, vector<2x128xf32> -> vector<2x128xf32>
    %199 = arith.addf %197, %198 : vector<2x128xf32>
    %200 = arith.addf %199, %17 : vector<2x128xf32>
    %201 = arith.negf %200 : vector<2x128xf32>
    %202 = math.exp %201 : vector<2x128xf32>
    %cst_41 = arith.constant 1.000000e+00 : f32
    %203 = vector.broadcast %cst_41 : f32 to vector<2x128xf32>
    %204 = arith.addf %203, %202 : vector<2x128xf32>
    %205 = arith.divf %203, %204 : vector<2x128xf32>
    %206 = math.tanh %200 : vector<2x128xf32>
    %207 = arith.select %5, %206, %205 : vector<2x128xi1>, vector<2x128xf32>
    %208 = vector.extract_strided_slice %207 {offsets = [0, 0], sizes = [2, 32], strides = [1, 1]} : vector<2x128xf32> to vector<2x32xf32>
    %209 = vector.extract_strided_slice %207 {offsets = [0, 32], sizes = [2, 32], strides = [1, 1]} : vector<2x128xf32> to vector<2x32xf32>
    %210 = vector.extract_strided_slice %207 {offsets = [0, 64], sizes = [2, 32], strides = [1, 1]} : vector<2x128xf32> to vector<2x32xf32>
    %211 = vector.extract_strided_slice %207 {offsets = [0, 96], sizes = [2, 32], strides = [1, 1]} : vector<2x128xf32> to vector<2x32xf32>
    %212 = arith.mulf %209, %175 : vector<2x32xf32>
    %213 = arith.mulf %208, %210 : vector<2x32xf32>
    %214 = arith.addf %212, %213 : vector<2x32xf32>
    %215 = math.tanh %214 : vector<2x32xf32>
    %216 = arith.mulf %211, %215 : vector<2x32xf32>
    %217 = vector.extract_strided_slice %11 {offsets = [10, 0], sizes = [2, 128], strides = [1, 1]} : vector<16x128xf32> to vector<2x128xf32>
    %cst_42 = arith.constant dense<0.000000e+00> : vector<2x128xf32>
    %218 = tpu.matmul %196, %12, %cst_42 {dimension_numbers = #tpu.dot_dimension_numbers<[1], [0], [0], [1], [0, 0, 1, 1], [], []>} : vector<2x32xf32>, vector<32x128xf32>, vector<2x128xf32> -> vector<2x128xf32>
    %219 = arith.addf %217, %218 : vector<2x128xf32>
    %220 = arith.negf %219 : vector<2x128xf32>
    %221 = math.exp %220 : vector<2x128xf32>
    %cst_43 = arith.constant 1.000000e+00 : f32
    %222 = vector.broadcast %cst_43 : f32 to vector<2x128xf32>
    %223 = arith.addf %222, %221 : vector<2x128xf32>
    %224 = arith.divf %222, %223 : vector<2x128xf32>
    %225 = math.tanh %219 : vector<2x128xf32>
    %226 = arith.select %5, %225, %224 : vector<2x128xi1>, vector<2x128xf32>
    %227 = vector.extract_strided_slice %226 {offsets = [0, 0], sizes = [2, 32], strides = [1, 1]} : vector<2x128xf32> to vector<2x32xf32>
    %228 = vector.extract_strided_slice %226 {offsets = [0, 32], sizes = [2, 32], strides = [1, 1]} : vector<2x128xf32> to vector<2x32xf32>
    %229 = vector.extract_strided_slice %226 {offsets = [0, 64], sizes = [2, 32], strides = [1, 1]} : vector<2x128xf32> to vector<2x32xf32>
    %230 = vector.extract_strided_slice %226 {offsets = [0, 96], sizes = [2, 32], strides = [1, 1]} : vector<2x128xf32> to vector<2x32xf32>
    %231 = arith.mulf %228, %194 : vector<2x32xf32>
    %232 = arith.mulf %227, %229 : vector<2x32xf32>
    %233 = arith.addf %231, %232 : vector<2x32xf32>
    %234 = math.tanh %233 : vector<2x32xf32>
    %235 = arith.mulf %230, %234 : vector<2x32xf32>
    %cst_44 = arith.constant dense<0.000000e+00> : vector<2x128xf32>
    %236 = tpu.matmul %235, %13, %cst_44 {dimension_numbers = #tpu.dot_dimension_numbers<[1], [0], [0], [1], [0, 0, 1, 1], [], []>} : vector<2x32xf32>, vector<32x128xf32>, vector<2x128xf32> -> vector<2x128xf32>
    %cst_45 = arith.constant dense<0.000000e+00> : vector<2x128xf32>
    %237 = tpu.matmul %216, %14, %cst_45 {dimension_numbers = #tpu.dot_dimension_numbers<[1], [0], [0], [1], [0, 0, 1, 1], [], []>} : vector<2x32xf32>, vector<32x128xf32>, vector<2x128xf32> -> vector<2x128xf32>
    %238 = arith.addf %236, %237 : vector<2x128xf32>
    %239 = arith.addf %238, %17 : vector<2x128xf32>
    %240 = arith.negf %239 : vector<2x128xf32>
    %241 = math.exp %240 : vector<2x128xf32>
    %cst_46 = arith.constant 1.000000e+00 : f32
    %242 = vector.broadcast %cst_46 : f32 to vector<2x128xf32>
    %243 = arith.addf %242, %241 : vector<2x128xf32>
    %244 = arith.divf %242, %243 : vector<2x128xf32>
    %245 = math.tanh %239 : vector<2x128xf32>
    %246 = arith.select %5, %245, %244 : vector<2x128xi1>, vector<2x128xf32>
    %247 = vector.extract_strided_slice %246 {offsets = [0, 0], sizes = [2, 32], strides = [1, 1]} : vector<2x128xf32> to vector<2x32xf32>
    %248 = vector.extract_strided_slice %246 {offsets = [0, 32], sizes = [2, 32], strides = [1, 1]} : vector<2x128xf32> to vector<2x32xf32>
    %249 = vector.extract_strided_slice %246 {offsets = [0, 64], sizes = [2, 32], strides = [1, 1]} : vector<2x128xf32> to vector<2x32xf32>
    %250 = vector.extract_strided_slice %246 {offsets = [0, 96], sizes = [2, 32], strides = [1, 1]} : vector<2x128xf32> to vector<2x32xf32>
    %251 = arith.mulf %248, %214 : vector<2x32xf32>
    %252 = arith.mulf %247, %249 : vector<2x32xf32>
    %253 = arith.addf %251, %252 : vector<2x32xf32>
    %254 = math.tanh %253 : vector<2x32xf32>
    %255 = arith.mulf %250, %254 : vector<2x32xf32>
    %256 = vector.extract_strided_slice %11 {offsets = [12, 0], sizes = [2, 128], strides = [1, 1]} : vector<16x128xf32> to vector<2x128xf32>
    %cst_47 = arith.constant dense<0.000000e+00> : vector<2x128xf32>
    %257 = tpu.matmul %235, %12, %cst_47 {dimension_numbers = #tpu.dot_dimension_numbers<[1], [0], [0], [1], [0, 0, 1, 1], [], []>} : vector<2x32xf32>, vector<32x128xf32>, vector<2x128xf32> -> vector<2x128xf32>
    %258 = arith.addf %256, %257 : vector<2x128xf32>
    %259 = arith.negf %258 : vector<2x128xf32>
    %260 = math.exp %259 : vector<2x128xf32>
    %cst_48 = arith.constant 1.000000e+00 : f32
    %261 = vector.broadcast %cst_48 : f32 to vector<2x128xf32>
    %262 = arith.addf %261, %260 : vector<2x128xf32>
    %263 = arith.divf %261, %262 : vector<2x128xf32>
    %264 = math.tanh %258 : vector<2x128xf32>
    %265 = arith.select %5, %264, %263 : vector<2x128xi1>, vector<2x128xf32>
    %266 = vector.extract_strided_slice %265 {offsets = [0, 0], sizes = [2, 32], strides = [1, 1]} : vector<2x128xf32> to vector<2x32xf32>
    %267 = vector.extract_strided_slice %265 {offsets = [0, 32], sizes = [2, 32], strides = [1, 1]} : vector<2x128xf32> to vector<2x32xf32>
    %268 = vector.extract_strided_slice %265 {offsets = [0, 64], sizes = [2, 32], strides = [1, 1]} : vector<2x128xf32> to vector<2x32xf32>
    %269 = vector.extract_strided_slice %265 {offsets = [0, 96], sizes = [2, 32], strides = [1, 1]} : vector<2x128xf32> to vector<2x32xf32>
    %270 = arith.mulf %267, %233 : vector<2x32xf32>
    %271 = arith.mulf %266, %268 : vector<2x32xf32>
    %272 = arith.addf %270, %271 : vector<2x32xf32>
    %273 = math.tanh %272 : vector<2x32xf32>
    %274 = arith.mulf %269, %273 : vector<2x32xf32>
    %cst_49 = arith.constant dense<0.000000e+00> : vector<2x128xf32>
    %275 = tpu.matmul %274, %13, %cst_49 {dimension_numbers = #tpu.dot_dimension_numbers<[1], [0], [0], [1], [0, 0, 1, 1], [], []>} : vector<2x32xf32>, vector<32x128xf32>, vector<2x128xf32> -> vector<2x128xf32>
    %cst_50 = arith.constant dense<0.000000e+00> : vector<2x128xf32>
    %276 = tpu.matmul %255, %14, %cst_50 {dimension_numbers = #tpu.dot_dimension_numbers<[1], [0], [0], [1], [0, 0, 1, 1], [], []>} : vector<2x32xf32>, vector<32x128xf32>, vector<2x128xf32> -> vector<2x128xf32>
    %277 = arith.addf %275, %276 : vector<2x128xf32>
    %278 = arith.addf %277, %17 : vector<2x128xf32>
    %279 = arith.negf %278 : vector<2x128xf32>
    %280 = math.exp %279 : vector<2x128xf32>
    %cst_51 = arith.constant 1.000000e+00 : f32
    %281 = vector.broadcast %cst_51 : f32 to vector<2x128xf32>
    %282 = arith.addf %281, %280 : vector<2x128xf32>
    %283 = arith.divf %281, %282 : vector<2x128xf32>
    %284 = math.tanh %278 : vector<2x128xf32>
    %285 = arith.select %5, %284, %283 : vector<2x128xi1>, vector<2x128xf32>
    %286 = vector.extract_strided_slice %285 {offsets = [0, 0], sizes = [2, 32], strides = [1, 1]} : vector<2x128xf32> to vector<2x32xf32>
    %287 = vector.extract_strided_slice %285 {offsets = [0, 32], sizes = [2, 32], strides = [1, 1]} : vector<2x128xf32> to vector<2x32xf32>
    %288 = vector.extract_strided_slice %285 {offsets = [0, 64], sizes = [2, 32], strides = [1, 1]} : vector<2x128xf32> to vector<2x32xf32>
    %289 = vector.extract_strided_slice %285 {offsets = [0, 96], sizes = [2, 32], strides = [1, 1]} : vector<2x128xf32> to vector<2x32xf32>
    %290 = arith.mulf %287, %253 : vector<2x32xf32>
    %291 = arith.mulf %286, %288 : vector<2x32xf32>
    %292 = arith.addf %290, %291 : vector<2x32xf32>
    %293 = math.tanh %292 : vector<2x32xf32>
    %294 = arith.mulf %289, %293 : vector<2x32xf32>
    %295 = vector.extract_strided_slice %11 {offsets = [14, 0], sizes = [2, 128], strides = [1, 1]} : vector<16x128xf32> to vector<2x128xf32>
    %cst_52 = arith.constant dense<0.000000e+00> : vector<2x128xf32>
    %296 = tpu.matmul %274, %12, %cst_52 {dimension_numbers = #tpu.dot_dimension_numbers<[1], [0], [0], [1], [0, 0, 1, 1], [], []>} : vector<2x32xf32>, vector<32x128xf32>, vector<2x128xf32> -> vector<2x128xf32>
    %297 = arith.addf %295, %296 : vector<2x128xf32>
    %298 = arith.negf %297 : vector<2x128xf32>
    %299 = math.exp %298 : vector<2x128xf32>
    %cst_53 = arith.constant 1.000000e+00 : f32
    %300 = vector.broadcast %cst_53 : f32 to vector<2x128xf32>
    %301 = arith.addf %300, %299 : vector<2x128xf32>
    %302 = arith.divf %300, %301 : vector<2x128xf32>
    %303 = math.tanh %297 : vector<2x128xf32>
    %304 = arith.select %5, %303, %302 : vector<2x128xi1>, vector<2x128xf32>
    %305 = vector.extract_strided_slice %304 {offsets = [0, 0], sizes = [2, 32], strides = [1, 1]} : vector<2x128xf32> to vector<2x32xf32>
    %306 = vector.extract_strided_slice %304 {offsets = [0, 32], sizes = [2, 32], strides = [1, 1]} : vector<2x128xf32> to vector<2x32xf32>
    %307 = vector.extract_strided_slice %304 {offsets = [0, 64], sizes = [2, 32], strides = [1, 1]} : vector<2x128xf32> to vector<2x32xf32>
    %308 = vector.extract_strided_slice %304 {offsets = [0, 96], sizes = [2, 32], strides = [1, 1]} : vector<2x128xf32> to vector<2x32xf32>
    %309 = arith.mulf %306, %272 : vector<2x32xf32>
    %310 = arith.mulf %305, %307 : vector<2x32xf32>
    %311 = arith.addf %309, %310 : vector<2x32xf32>
    %312 = math.tanh %311 : vector<2x32xf32>
    %313 = arith.mulf %308, %312 : vector<2x32xf32>
    %cst_54 = arith.constant dense<0.000000e+00> : vector<2x128xf32>
    %314 = tpu.matmul %313, %13, %cst_54 {dimension_numbers = #tpu.dot_dimension_numbers<[1], [0], [0], [1], [0, 0, 1, 1], [], []>} : vector<2x32xf32>, vector<32x128xf32>, vector<2x128xf32> -> vector<2x128xf32>
    %cst_55 = arith.constant dense<0.000000e+00> : vector<2x128xf32>
    %315 = tpu.matmul %294, %14, %cst_55 {dimension_numbers = #tpu.dot_dimension_numbers<[1], [0], [0], [1], [0, 0, 1, 1], [], []>} : vector<2x32xf32>, vector<32x128xf32>, vector<2x128xf32> -> vector<2x128xf32>
    %316 = arith.addf %314, %315 : vector<2x128xf32>
    %317 = arith.addf %316, %17 : vector<2x128xf32>
    %318 = arith.negf %317 : vector<2x128xf32>
    %319 = math.exp %318 : vector<2x128xf32>
    %cst_56 = arith.constant 1.000000e+00 : f32
    %320 = vector.broadcast %cst_56 : f32 to vector<2x128xf32>
    %321 = arith.addf %320, %319 : vector<2x128xf32>
    %322 = arith.divf %320, %321 : vector<2x128xf32>
    %323 = math.tanh %317 : vector<2x128xf32>
    %324 = arith.select %5, %323, %322 : vector<2x128xi1>, vector<2x128xf32>
    %325 = vector.extract_strided_slice %324 {offsets = [0, 0], sizes = [2, 32], strides = [1, 1]} : vector<2x128xf32> to vector<2x32xf32>
    %326 = vector.extract_strided_slice %324 {offsets = [0, 32], sizes = [2, 32], strides = [1, 1]} : vector<2x128xf32> to vector<2x32xf32>
    %327 = vector.extract_strided_slice %324 {offsets = [0, 64], sizes = [2, 32], strides = [1, 1]} : vector<2x128xf32> to vector<2x32xf32>
    %328 = vector.extract_strided_slice %324 {offsets = [0, 96], sizes = [2, 32], strides = [1, 1]} : vector<2x128xf32> to vector<2x32xf32>
    %329 = arith.mulf %326, %292 : vector<2x32xf32>
    %330 = arith.mulf %325, %327 : vector<2x32xf32>
    %331 = arith.addf %329, %330 : vector<2x32xf32>
    %332 = math.tanh %331 : vector<2x32xf32>
    %333 = arith.mulf %328, %332 : vector<2x32xf32>
    %c0_57 = arith.constant 0 : index
    %c0_58 = arith.constant 0 : index
    %334 = vector.load %arg7[%c0_57, %c0_58] : memref<32x3xf32, #tpu.memory_space<vmem>>, vector<32x3xf32>
    %cst_59 = arith.constant dense<0.000000e+00> : vector<2x3xf32>
    %335 = tpu.matmul %333, %334, %cst_59 {dimension_numbers = #tpu.dot_dimension_numbers<[1], [0], [0], [1], [0, 0, 1, 1], [], []>} : vector<2x32xf32>, vector<32x3xf32>, vector<2x3xf32> -> vector<2x3xf32>
    %c0_60 = arith.constant 0 : index
    %c0_61 = arith.constant 0 : index
    %336 = vector.load %arg8[%c0_60, %c0_61] : memref<1x3xf32, #tpu.memory_space<vmem>>, vector<1x3xf32>
    %337 = vector.broadcast %336 : vector<1x3xf32> to vector<2x3xf32>
    %338 = arith.addf %335, %337 : vector<2x3xf32>
    %c0_62 = arith.constant 0 : index
    %c0_63 = arith.constant 0 : index
    %339 = vector.load %arg9[%c0_62, %c0_63] : memref<2x3xf32, #tpu.memory_space<vmem>>, vector<2x3xf32>
    tpu.vector_store %arg9[%c0_62, %c0_63], %338 {strides = array<i32>} : memref<2x3xf32, #tpu.memory_space<vmem>>, vector<2x3xf32>,
    return
  }
}

</mosaic_0001>

<llo_original>
// kernel: lstm_model_forward.1
$region0: #{lstm_model_forward.1}
  #allocation0 [shape = 'u32[]', space=smem, size = 0x4, offset = 0x4, fixed_abs, tag = 'smem constant byte address 0x4 - core index']
  #allocation1 [shape = 'u32[72,128]{1,0:T(1,128)}', space=vmem, size = 0x9000, scoped, tag = 'internal scratch']
  %s0 = inlined_call_operand.vmem [shape: f32[16,4], index: 0, kind: input, shape index: {}]
  %s1 = inlined_call_operand.vmem [shape: f32[4,128], index: 1, kind: input, shape index: {}]
  %s2 = inlined_call_operand.vmem [shape: f32[32,128], index: 2, kind: input, shape index: {}]
  %s3 = inlined_call_operand.vmem [shape: f32[1,128], index: 3, kind: input, shape index: {}]
  %s4 = inlined_call_operand.hbm [shape: f32[32,128], index: 4, kind: input, shape index: {}]
  %s5 = inlined_call_operand.hbm [shape: f32[32,128], index: 5, kind: input, shape index: {}]
  %s6 = inlined_call_operand.vmem [shape: f32[1,128], index: 6, kind: input, shape index: {}]
  %s7 = inlined_call_operand.vmem [shape: f32[32,3], index: 7, kind: input, shape index: {}]
  %s8 = inlined_call_operand.vmem [shape: f32[1,3], index: 8, kind: input, shape index: {}]
  %s9 = inlined_call_operand.hbm [shape: f32[2,3], index: 9, kind: output, shape index: {}]
  %s10 = sld [smem:[#allocation0]]
  $region54: #{lstm_model_forward.1} parent=0
    _
  %s12 = ssub.s32 1, %s10
  %s13 = scalar_select 0, %s12, %s10
  $region1: #{lstm_model_forward.1} parent=0
    #allocation2 [shape = 'u8[16384]{0}', space=vmem, size = 0x4000, scoped, tag = 'input window, operand 4, single buffered']
    #allocation3 [shape = 's32[1]{0}', space=sflag, size = 0x4, scoped, tag = 'scoped memory for lstm_model_forward.1']
    #allocation4 [shape = 's32[1]{0}', space=sflag, size = 0x4, scoped, tag = 'scoped memory for lstm_model_forward.1']
    #allocation5 [shape = 'u8[16384]{0}', space=vmem, size = 0x4000, scoped, tag = 'input window, operand 5, single buffered']
    #allocation6 [shape = 's32[1]{0}', space=sflag, size = 0x4, scoped, tag = 'scoped memory for lstm_model_forward.1']
    #allocation7 [shape = 'u8[1024]{0}', space=vmem, size = 0x400, scoped, tag = 'output window, operand 0, single buffered']
    %14 = vsyncpa [#allocation3], 0
    %15 = vsyncpa [#allocation6], 0
    %16 = vsyncpa [#allocation4], 0
    // Predicated region
    $region2: #{lstm_model_forward.1} parent=1 // pred_check
      _
    $region3: #{lstm_model_forward.1} parent=1 // pred_check_branch
      %18 = sbr.rel (0) target = $region5
    $region4: #{lstm_model_forward.1} parent=1 // pred_region
      _
    $region5: #{lstm_model_forward.1} parent=1 // pred_fallthru
      _
    // Predicated region
    $region6: #{lstm_model_forward.1} parent=1 // pred_check
      _
    $region7: #{lstm_model_forward.1} parent=1 // pred_check_branch
      %20 = sbr.rel (0) target = $region9
    $region8: #{lstm_model_forward.1} parent=1 // pred_region
      _
    $region9: #{lstm_model_forward.1} parent=1 // pred_fallthru
      _
    // Predicated region
    $region10: #{lstm_model_forward.1} parent=1 // pred_check
      _
    $region11: #{lstm_model_forward.1} parent=1 // pred_check_branch
      %22 = sbr.rel (0) target = $region13
    $region12: #{lstm_model_forward.1} parent=1 // pred_region
      _
    $region13: #{lstm_model_forward.1} parent=1 // pred_fallthru
      _
    // Predicated region
    $region14: #{lstm_model_forward.1} parent=1 // pred_check
      _
    $region15: #{lstm_model_forward.1} parent=1 // pred_check_branch
      %24 = sbr.rel (0) target = $region17
    $region16: #{lstm_model_forward.1} parent=1 // pred_region
      _
    $region17: #{lstm_model_forward.1} parent=1 // pred_fallthru
      _
    // Predicated region
    $region18: #{lstm_model_forward.1} parent=1 // pred_check
      _
    $region19: #{lstm_model_forward.1} parent=1 // pred_check_branch
      %26 = sbr.rel (0) target = $region21
    $region20: #{lstm_model_forward.1} parent=1 // pred_region
      %28 = vsyncadd [#allocation3], 0
      %s29 = sshll.u32 %s4, 4
      %s30 = int_to_ptr.hbm [resolvable:$true] %s29
      %s31 = sshll.u32 [#allocation2], 4
      %s32 = int_to_ptr.vmem [resolvable:$true] %s31
      %37 = dma.hbm_to_vmem [thread:$0]  %s30, 512, %s32, [#allocation3], 128, 128, 8
    $region21: #{lstm_model_forward.1} parent=1 // pred_fallthru
      _
    // Predicated region
    $region22: #{lstm_model_forward.1} parent=1 // pred_check
      _
    $region23: #{lstm_model_forward.1} parent=1 // pred_check_branch
      %39 = sbr.rel (0) target = $region25
    $region24: #{lstm_model_forward.1} parent=1 // pred_region
      %41 = vsyncadd [#allocation6], 0
      %s42 = sshll.u32 %s5, 4
      %s43 = int_to_ptr.hbm [resolvable:$true] %s42
      %s44 = sshll.u32 [#allocation5], 4
      %s45 = int_to_ptr.vmem [resolvable:$true] %s44
      %50 = dma.hbm_to_vmem [thread:$0]  %s43, 512, %s45, [#allocation6], 128, 128, 8
    $region25: #{lstm_model_forward.1} parent=1 // pred_fallthru
      _
    // Predicated region
    $region26: #{lstm_model_forward.1} parent=1 // pred_check
      _
    $region27: #{lstm_model_forward.1} parent=1 // pred_check_branch
      %52 = sbr.rel (0) target = $region29
    $region28: #{lstm_model_forward.1} parent=1 // pred_region
      _
    $region29: #{lstm_model_forward.1} parent=1 // pred_fallthru
      _
    // Predicated region
    $region30: #{lstm_model_forward.1} parent=1 // pred_check
      _
    $region31: #{lstm_model_forward.1} parent=1 // pred_check_branch
      %54 = sbr.rel (0) target = $region33
    $region32: #{lstm_model_forward.1} parent=1 // pred_region
      _
    $region33: #{lstm_model_forward.1} parent=1 // pred_fallthru
      _
    // Predicated region
    $region34: #{lstm_model_forward.1} parent=1 // pred_check
      _
    $region35: #{lstm_model_forward.1} parent=1 // pred_check_branch
      %56 = sbr.rel (0) target = $region37
    $region36: #{lstm_model_forward.1} parent=1 // pred_region
      _
    $region37: #{lstm_model_forward.1} parent=1 // pred_fallthru
      _
    // Predicated region
    $region38: #{lstm_model_forward.1} parent=1 // pred_check
      _
    $region39: #{lstm_model_forward.1} parent=1 // pred_check_branch
      %58 = sbr.rel (0) target = $region41
    $region40: #{lstm_model_forward.1} parent=1 // pred_region
      %60 = dma.done [#allocation3], 512
    $region41: #{lstm_model_forward.1} parent=1 // pred_fallthru
      _
    // Predicated region
    $region42: #{lstm_model_forward.1} parent=1 // pred_check
      _
    $region43: #{lstm_model_forward.1} parent=1 // pred_check_branch
      %62 = sbr.rel (0) target = $region45
    $region44: #{lstm_model_forward.1} parent=1 // pred_region
      %64 = dma.done [#allocation6], 512
    $region45: #{lstm_model_forward.1} parent=1 // pred_fallthru
      _
    %v65 = vlaneseq
    %v66 = vand.u32 %v65, 127
    %vm67 = vcmp.ge.s32.totalorder %v66, 64
    %vm68 = vcmp.lt.s32.totalorder %v66, 96
    %vm69 = vmand %vm67, %vm68
    %v70 = vld [vmem:[%s0] sm:$0xff]
    %v71 = vld [vmem:[%s0 + $0x8] sm:$0xff]
    %v72 = vld [vmem:[%s1] sm:$0xf]
    %v73 = vld [vmem:[%s3] sm:$0x1]
    %v75 = vperm.slane %v73, 0
    %vm77 = vcmask 31744
    %v79 = vsel %vm77, %v70, 0
    %v82 = vsel %vm77, %v71, 0
    %vm84 = vcmask 1043456
    %v86 = vsel %vm84, %v72, 0
    %88 = vmatpush.msra.mxu0 0.0
    %89 = vmatpush.msra.mxu0 0.0
    %90 = vmatpush.msra.mxu0 0.0
    %91 = vmatpush.msra.mxu0 0.0
    %92 = vmatpush.msra.mxu0 0.0
    %93 = vmatpush.msra.mxu0 0.0
    %94 = vmatpush.msra.mxu0 0.0
    %95 = vmatpush.msra.mxu0 0.0
    %96 = vmatpush.msra.mxu0 0.0
    %97 = vmatpush.msra.mxu0 0.0
    %98 = vmatpush.msra.mxu0 0.0
    %99 = vmatpush.msra.mxu0 0.0
    %100 = vmatpush.msra.mxu0 0.0
    %101 = vmatpush.msra.mxu0 0.0
    %102 = vmatpush.msra.mxu0 0.0
    %103 = vmatpush.msra.mxu0 %v86
    %104 = vmatmul.f32.gmra.mxu0 %v79
    %v105 = vpop.f32.mrf.mxu0
    %v106 = vadd.f32 %v75, %v105
    %107 = vmatmul.f32.gmra.mxu0 %v82
    %v108 = vpop.f32.mrf.mxu0
    %v109 = vadd.f32 %v75, %v108
    %110 = vdwg.mxu0
    %v111 = vld [vmem:[%s2] sm:$0xff]
    %v112 = vld [vmem:[%s2 + $0x8] sm:$0xff]
    %v113 = vld [vmem:[%s2 + $0x10] sm:$0xff]
    %v114 = vld [vmem:[%s2 + $0x18] sm:$0xff]
    %v115 = vld [vmem:[#allocation2] sm:$0xff]
    %v116 = vld [vmem:[#allocation2 + $0x8] sm:$0xff]
    %v117 = vld [vmem:[#allocation2 + $0x10] sm:$0xff]
    %v118 = vld [vmem:[#allocation2 + $0x18] sm:$0xff]
    %v119 = vld [vmem:[#allocation5] sm:$0xff]
    %v120 = vld [vmem:[#allocation5 + $0x8] sm:$0xff]
    %v121 = vld [vmem:[#allocation5 + $0x10] sm:$0xff]
    %v122 = vld [vmem:[#allocation5 + $0x18] sm:$0xff]
    %v123 = vld [vmem:[%s6] sm:$0x1]
    %v125 = vperm.slane %v123, 0
    %vm127 = vcmask 261120
    %v129 = vsel %vm127, 0.0, 0
    %131 = vmatpush.msra.mxu0 0.0
    %132 = vmatpush.msra.mxu0 0.0
    %133 = vmatpush.msra.mxu0 0.0
    %134 = vmatpush.msra.mxu0 0.0
    %135 = vmatpush.msra.mxu0 0.0
    %136 = vmatpush.msra.mxu0 0.0
    %137 = vmatpush.msra.mxu0 0.0
    %138 = vmatpush.msra.mxu0 0.0
    %139 = vmatpush.msra.mxu0 0.0
    %140 = vmatpush.msra.mxu0 0.0
    %141 = vmatpush.msra.mxu0 0.0
    %142 = vmatpush.msra.mxu0 0.0
    %143 = vmatpush.msra.mxu0 %v114
    %144 = vmatpush.msra.mxu0 %v113
    %145 = vmatpush.msra.mxu0 %v112
    %146 = vmatpush.msra.mxu0 %v111
    %147 = vmatmul.f32.gmra.mxu0 %v129
    %v148 = vpop.f32.mrf.mxu0
    %v149 = vadd.f32 0.0, %v148
    %150 = vdwg.mxu0
    %v151 = vadd.f32 %v106, %v149
    %v152 = vxor.u32 %v151, 2147483648
    %v153 = vmul.f32 %v152, 1.442695
    %v154 = vpow.pop %v153
    %v155 = vadd.f32 %v154, 1.0
    %v156 = vrcp.pop %v155
    %v157 = vmul.f32 %v155, %v156
    %v158 = vsub.f32 1.0, %v157
    %v159 = vmul.f32 %v156, %v158
    %v160 = vadd.f32 %v156, %v159
    %vm161 = vweird.f32 %v155
    %vm162 = vweird.f32 %v156
    %vm163 = vmor %vm161, %vm162
    %v164 = vsel %vm163, %v156, %v160
    %v165 = vand.u32 2147483647, %v155
    %vm166 = vcmp.eq.f32.partialorder %v165, 8.507059e+37
    %v167 = vand.u32 %v155, 2147483648
    %v168 = vor.u32 1.1754944e-38, %v167
    %v169 = vsel %vm166, %v168, %v164
    %v170 = vmul.f32 1.0, %v169
    %v171 = vtanh.pop %v151
    %v172 = vsel %vm69, %v171, %v170
    %v173 = vmul.f32 %v172, 0.0
    %175 = vrot.lane.b32.xlu0 %v172, 64
    %v176 = vpop.permute.xlu0 %175
    %v178 = vmul.f32 %v172, %v176
    %180 = vrot.lane.b32.xlu0 %v178, 32
    %v181 = vpop.permute.xlu0 %180
    %v183 = vadd.f32 %v173, %v181
    %v184 = vtanh.pop %v183
    %186 = vrot.lane.b32.xlu0 %v184, 64
    %v187 = vpop.permute.xlu0 %186
    %v189 = vmul.f32 %v172, %v187
    %190 = vmatpush.msra.mxu0 0.0
    %191 = vmatpush.msra.mxu0 0.0
    %192 = vmatpush.msra.mxu0 0.0
    %193 = vmatpush.msra.mxu0 0.0
    %194 = vmatpush.msra.mxu0 0.0
    %195 = vmatpush.msra.mxu0 0.0
    %196 = vmatpush.msra.mxu0 0.0
    %197 = vmatpush.msra.mxu0 0.0
    %198 = vmatpush.msra.mxu0 0.0
    %199 = vmatpush.msra.mxu0 0.0
    %200 = vmatpush.msra.mxu0 0.0
    %201 = vmatpush.msra.mxu0 0.0
    %202 = vmatpush.msra.mxu0 %v122
    %203 = vmatpush.msra.mxu0 %v121
    %204 = vmatpush.msra.mxu0 %v120
    %205 = vmatpush.msra.mxu0 %v119
    %206 = vmatmul.f32.gmra.mxu0 %v129
    %v207 = vpop.f32.mrf.mxu0
    %v208 = vadd.f32 0.0, %v207
    %209 = vdwg.mxu0
    %211 = vrot.lane.b32.xlu0 %v189, 32
    %v212 = vpop.permute.xlu0 %211
    %v213 = vsel %vm127, %v212, 0
    %215 = vmatpush.msra.mxu0 0.0
    %216 = vmatpush.msra.mxu0 0.0
    %217 = vmatpush.msra.mxu0 0.0
    %218 = vmatpush.msra.mxu0 0.0
    %219 = vmatpush.msra.mxu0 0.0
    %220 = vmatpush.msra.mxu0 0.0
    %221 = vmatpush.msra.mxu0 0.0
    %222 = vmatpush.msra.mxu0 0.0
    %223 = vmatpush.msra.mxu0 0.0
    %224 = vmatpush.msra.mxu0 0.0
    %225 = vmatpush.msra.mxu0 0.0
    %226 = vmatpush.msra.mxu0 0.0
    %227 = vmatpush.msra.mxu0 %v118
    %228 = vmatpush.msra.mxu0 %v117
    %229 = vmatpush.msra.mxu0 %v116
    %230 = vmatpush.msra.mxu0 %v115
    %231 = vmatmul.f32.gmra.mxu0 %v213
    %v232 = vpop.f32.mrf.mxu0
    %v233 = vadd.f32 %v208, %v232
    %234 = vdwg.mxu0
    %v235 = vadd.f32 %v233, %v125
    %v236 = vxor.u32 %v235, 2147483648
    %v237 = vmul.f32 %v236, 1.442695
    %v238 = vpow.pop %v237
    %v239 = vadd.f32 %v238, 1.0
    %v240 = vrcp.pop %v239
    %v241 = vmul.f32 %v239, %v240
    %v242 = vsub.f32 1.0, %v241
    %v243 = vmul.f32 %v240, %v242
    %v244 = vadd.f32 %v240, %v243
    %vm245 = vweird.f32 %v239
    %vm246 = vweird.f32 %v240
    %vm247 = vmor %vm245, %vm246
    %v248 = vsel %vm247, %v240, %v244
    %v249 = vand.u32 2147483647, %v239
    %vm250 = vcmp.eq.f32.partialorder %v249, 8.507059e+37
    %v251 = vand.u32 %v239, 2147483648
    %v252 = vor.u32 1.1754944e-38, %v251
    %v253 = vsel %vm250, %v252, %v248
    %v254 = vmul.f32 1.0, %v253
    %v255 = vtanh.pop %v235
    %v256 = vsel %vm69, %v255, %v254
    %v257 = vmul.f32 %v256, 0.0
    %259 = vrot.lane.b32.xlu0 %v256, 64
    %v260 = vpop.permute.xlu0 %259
    %v262 = vmul.f32 %v256, %v260
    %264 = vrot.lane.b32.xlu0 %v262, 32
    %v265 = vpop.permute.xlu0 %264
    %v267 = vadd.f32 %v257, %v265
    %v268 = vtanh.pop %v267
    %270 = vrot.lane.b32.xlu0 %v268, 64
    %v271 = vpop.permute.xlu0 %270
    %v273 = vmul.f32 %v256, %v271
    %274 = vmatpush.msra.mxu0 0.0
    %275 = vmatpush.msra.mxu0 0.0
    %276 = vmatpush.msra.mxu0 0.0
    %277 = vmatpush.msra.mxu0 0.0
    %278 = vmatpush.msra.mxu0 0.0
    %279 = vmatpush.msra.mxu0 0.0
    %280 = vmatpush.msra.mxu0 0.0
    %281 = vmatpush.msra.mxu0 0.0
    %282 = vmatpush.msra.mxu0 0.0
    %283 = vmatpush.msra.mxu0 0.0
    %284 = vmatpush.msra.mxu0 0.0
    %285 = vmatpush.msra.mxu0 0.0
    %286 = vmatpush.msra.mxu0 %v114
    %287 = vmatpush.msra.mxu0 %v113
    %288 = vmatpush.msra.mxu0 %v112
    %289 = vmatpush.msra.mxu0 %v111
    %290 = vmatmul.f32.gmra.mxu0 %v213
    %v291 = vpop.f32.mrf.mxu0
    %v292 = vadd.f32 0.0, %v291
    %293 = vdwg.mxu0
    %v295 = vrot.slane %v292, 6
    %v297 = vadd.f32 %v106, %v295
    %v298 = vxor.u32 %v297, 2147483648
    %v299 = vmul.f32 %v298, 1.442695
    %v300 = vpow.pop %v299
    %v301 = vadd.f32 %v300, 1.0
    %v302 = vrcp.pop %v301
    %v303 = vmul.f32 %v301, %v302
    %v304 = vsub.f32 1.0, %v303
    %v305 = vmul.f32 %v302, %v304
    %v306 = vadd.f32 %v302, %v305
    %vm307 = vweird.f32 %v301
    %vm308 = vweird.f32 %v302
    %vm309 = vmor %vm307, %vm308
    %v310 = vsel %vm309, %v302, %v306
    %v311 = vand.u32 2147483647, %v301
    %vm312 = vcmp.eq.f32.partialorder %v311, 8.507059e+37
    %v313 = vand.u32 %v301, 2147483648
    %v314 = vor.u32 1.1754944e-38, %v313
    %v315 = vsel %vm312, %v314, %v310
    %v316 = vmul.f32 1.0, %v315
    %v317 = vtanh.pop %v297
    %v318 = vsel %vm69, %v317, %v316
    %v320 = vrot.slane %v183, 6
    %v322 = vmul.f32 %v318, %v320
    %324 = vrot.lane.b32.xlu0 %v318, 64
    %v325 = vpop.permute.xlu0 %324
    %v327 = vmul.f32 %v318, %v325
    %329 = vrot.lane.b32.xlu0 %v327, 32
    %v330 = vpop.permute.xlu0 %329
    %v332 = vadd.f32 %v322, %v330
    %v333 = vtanh.pop %v332
    %335 = vrot.lane.b32.xlu0 %v333, 64
    %v336 = vpop.permute.xlu0 %335
    %v338 = vmul.f32 %v318, %v336
    %340 = vrot.lane.b32.xlu0 %v273, 32
    %v341 = vpop.permute.xlu0 %340
    %v342 = vsel %vm127, %v341, 0
    %344 = vmatpush.msra.mxu0 0.0
    %345 = vmatpush.msra.mxu0 0.0
    %346 = vmatpush.msra.mxu0 0.0
    %347 = vmatpush.msra.mxu0 0.0
    %348 = vmatpush.msra.mxu0 0.0
    %349 = vmatpush.msra.mxu0 0.0
    %350 = vmatpush.msra.mxu0 0.0
    %351 = vmatpush.msra.mxu0 0.0
    %352 = vmatpush.msra.mxu0 0.0
    %353 = vmatpush.msra.mxu0 0.0
    %354 = vmatpush.msra.mxu0 0.0
    %355 = vmatpush.msra.mxu0 0.0
    %356 = vmatpush.msra.mxu0 %v122
    %357 = vmatpush.msra.mxu0 %v121
    %358 = vmatpush.msra.mxu0 %v120
    %359 = vmatpush.msra.mxu0 %v119
    %360 = vmatmul.f32.gmra.mxu0 %v342
    %v361 = vpop.f32.mrf.mxu0
    %v362 = vadd.f32 0.0, %v361
    %363 = vdwg.mxu0
    %v365 = vrot.slane %v338, 2
    %366 = vrot.lane.b32.xlu0 %v365, 32
    %v367 = vpop.permute.xlu0 %366
    %v368 = vsel %vm127, %v367, 0
    %370 = vmatpush.msra.mxu0 0.0
    %371 = vmatpush.msra.mxu0 0.0
    %372 = vmatpush.msra.mxu0 0.0
    %373 = vmatpush.msra.mxu0 0.0
    %374 = vmatpush.msra.mxu0 0.0
    %375 = vmatpush.msra.mxu0 0.0
    %376 = vmatpush.msra.mxu0 0.0
    %377 = vmatpush.msra.mxu0 0.0
    %378 = vmatpush.msra.mxu0 0.0
    %379 = vmatpush.msra.mxu0 0.0
    %380 = vmatpush.msra.mxu0 0.0
    %381 = vmatpush.msra.mxu0 0.0
    %382 = vmatpush.msra.mxu0 %v118
    %383 = vmatpush.msra.mxu0 %v117
    %384 = vmatpush.msra.mxu0 %v116
    %385 = vmatpush.msra.mxu0 %v115
    %386 = vmatmul.f32.gmra.mxu0 %v368
    %v387 = vpop.f32.mrf.mxu0
    %v388 = vadd.f32 %v362, %v387
    %389 = vdwg.mxu0
    %v390 = vadd.f32 %v388, %v125
    %v391 = vxor.u32 %v390, 2147483648
    %v392 = vmul.f32 %v391, 1.442695
    %v393 = vpow.pop %v392
    %v394 = vadd.f32 %v393, 1.0
    %v395 = vrcp.pop %v394
    %v396 = vmul.f32 %v394, %v395
    %v397 = vsub.f32 1.0, %v396
    %v398 = vmul.f32 %v395, %v397
    %v399 = vadd.f32 %v395, %v398
    %vm400 = vweird.f32 %v394
    %vm401 = vweird.f32 %v395
    %vm402 = vmor %vm400, %vm401
    %v403 = vsel %vm402, %v395, %v399
    %v404 = vand.u32 2147483647, %v394
    %vm405 = vcmp.eq.f32.partialorder %v404, 8.507059e+37
    %v406 = vand.u32 %v394, 2147483648
    %v407 = vor.u32 1.1754944e-38, %v406
    %v408 = vsel %vm405, %v407, %v403
    %v409 = vmul.f32 1.0, %v408
    %v410 = vtanh.pop %v390
    %v411 = vsel %vm69, %v410, %v409
    %v412 = vmul.f32 %v411, %v267
    %414 = vrot.lane.b32.xlu0 %v411, 64
    %v415 = vpop.permute.xlu0 %414
    %v417 = vmul.f32 %v411, %v415
    %419 = vrot.lane.b32.xlu0 %v417, 32
    %v420 = vpop.permute.xlu0 %419
    %v422 = vadd.f32 %v412, %v420
    %v423 = vtanh.pop %v422
    %425 = vrot.lane.b32.xlu0 %v423, 64
    %v426 = vpop.permute.xlu0 %425
    %v428 = vmul.f32 %v411, %v426
    %429 = vmatpush.msra.mxu0 0.0
    %430 = vmatpush.msra.mxu0 0.0
    %431 = vmatpush.msra.mxu0 0.0
    %432 = vmatpush.msra.mxu0 0.0
    %433 = vmatpush.msra.mxu0 0.0
    %434 = vmatpush.msra.mxu0 0.0
    %435 = vmatpush.msra.mxu0 0.0
    %436 = vmatpush.msra.mxu0 0.0
    %437 = vmatpush.msra.mxu0 0.0
    %438 = vmatpush.msra.mxu0 0.0
    %439 = vmatpush.msra.mxu0 0.0
    %440 = vmatpush.msra.mxu0 0.0
    %441 = vmatpush.msra.mxu0 %v114
    %442 = vmatpush.msra.mxu0 %v113
    %443 = vmatpush.msra.mxu0 %v112
    %444 = vmatpush.msra.mxu0 %v111
    %445 = vmatmul.f32.gmra.mxu0 %v368
    %v446 = vpop.f32.mrf.mxu0
    %v447 = vadd.f32 0.0, %v446
    %448 = vdwg.mxu0
    %v450 = vrot.slane %v447, 4
    %v452 = vadd.f32 %v106, %v450
    %v453 = vxor.u32 %v452, 2147483648
    %v454 = vmul.f32 %v453, 1.442695
    %v455 = vpow.pop %v454
    %v456 = vadd.f32 %v455, 1.0
    %v457 = vrcp.pop %v456
    %v458 = vmul.f32 %v456, %v457
    %v459 = vsub.f32 1.0, %v458
    %v460 = vmul.f32 %v457, %v459
    %v461 = vadd.f32 %v457, %v460
    %vm462 = vweird.f32 %v456
    %vm463 = vweird.f32 %v457
    %vm464 = vmor %vm462, %vm463
    %v465 = vsel %vm464, %v457, %v461
    %v466 = vand.u32 2147483647, %v456
    %vm467 = vcmp.eq.f32.partialorder %v466, 8.507059e+37
    %v468 = vand.u32 %v456, 2147483648
    %v469 = vor.u32 1.1754944e-38, %v468
    %v470 = vsel %vm467, %v469, %v465
    %v471 = vmul.f32 1.0, %v470
    %v472 = vtanh.pop %v452
    %v473 = vsel %vm69, %v472, %v471
    %v475 = vrot.slane %v332, 6
    %v477 = vmul.f32 %v473, %v475
    %479 = vrot.lane.b32.xlu0 %v473, 64
    %v480 = vpop.permute.xlu0 %479
    %v482 = vmul.f32 %v473, %v480
    %484 = vrot.lane.b32.xlu0 %v482, 32
    %v485 = vpop.permute.xlu0 %484
    %v487 = vadd.f32 %v477, %v485
    %v488 = vtanh.pop %v487
    %490 = vrot.lane.b32.xlu0 %v488, 64
    %v491 = vpop.permute.xlu0 %490
    %v493 = vmul.f32 %v473, %v491
    %495 = vrot.lane.b32.xlu0 %v428, 32
    %v496 = vpop.permute.xlu0 %495
    %v497 = vsel %vm127, %v496, 0
    %499 = vmatpush.msra.mxu0 0.0
    %500 = vmatpush.msra.mxu0 0.0
    %501 = vmatpush.msra.mxu0 0.0
    %502 = vmatpush.msra.mxu0 0.0
    %503 = vmatpush.msra.mxu0 0.0
    %504 = vmatpush.msra.mxu0 0.0
    %505 = vmatpush.msra.mxu0 0.0
    %506 = vmatpush.msra.mxu0 0.0
    %507 = vmatpush.msra.mxu0 0.0
    %508 = vmatpush.msra.mxu0 0.0
    %509 = vmatpush.msra.mxu0 0.0
    %510 = vmatpush.msra.mxu0 0.0
    %511 = vmatpush.msra.mxu0 %v122
    %512 = vmatpush.msra.mxu0 %v121
    %513 = vmatpush.msra.mxu0 %v120
    %514 = vmatpush.msra.mxu0 %v119
    %515 = vmatmul.f32.gmra.mxu0 %v497
    %v516 = vpop.f32.mrf.mxu0
    %v517 = vadd.f32 0.0, %v516
    %518 = vdwg.mxu0
    %v520 = vrot.slane %v493, 4
    %521 = vrot.lane.b32.xlu0 %v520, 32
    %v522 = vpop.permute.xlu0 %521
    %v523 = vsel %vm127, %v522, 0
    %525 = vmatpush.msra.mxu0 0.0
    %526 = vmatpush.msra.mxu0 0.0
    %527 = vmatpush.msra.mxu0 0.0
    %528 = vmatpush.msra.mxu0 0.0
    %529 = vmatpush.msra.mxu0 0.0
    %530 = vmatpush.msra.mxu0 0.0
    %531 = vmatpush.msra.mxu0 0.0
    %532 = vmatpush.msra.mxu0 0.0
    %533 = vmatpush.msra.mxu0 0.0
    %534 = vmatpush.msra.mxu0 0.0
    %535 = vmatpush.msra.mxu0 0.0
    %536 = vmatpush.msra.mxu0 0.0
    %537 = vmatpush.msra.mxu0 %v118
    %538 = vmatpush.msra.mxu0 %v117
    %539 = vmatpush.msra.mxu0 %v116
    %540 = vmatpush.msra.mxu0 %v115
    %541 = vmatmul.f32.gmra.mxu0 %v523
    %v542 = vpop.f32.mrf.mxu0
    %v543 = vadd.f32 %v517, %v542
    %544 = vdwg.mxu0
    %v545 = vadd.f32 %v543, %v125
    %v546 = vxor.u32 %v545, 2147483648
    %v547 = vmul.f32 %v546, 1.442695
    %v548 = vpow.pop %v547
    %v549 = vadd.f32 %v548, 1.0
    %v550 = vrcp.pop %v549
    %v551 = vmul.f32 %v549, %v550
    %v552 = vsub.f32 1.0, %v551
    %v553 = vmul.f32 %v550, %v552
    %v554 = vadd.f32 %v550, %v553
    %vm555 = vweird.f32 %v549
    %vm556 = vweird.f32 %v550
    %vm557 = vmor %vm555, %vm556
    %v558 = vsel %vm557, %v550, %v554
    %v559 = vand.u32 2147483647, %v549
    %vm560 = vcmp.eq.f32.partialorder %v559, 8.507059e+37
    %v561 = vand.u32 %v549, 2147483648
    %v562 = vor.u32 1.1754944e-38, %v561
    %v563 = vsel %vm560, %v562, %v558
    %v564 = vmul.f32 1.0, %v563
    %v565 = vtanh.pop %v545
    %v566 = vsel %vm69, %v565, %v564
    %v567 = vmul.f32 %v566, %v422
    %569 = vrot.lane.b32.xlu0 %v566, 64
    %v570 = vpop.permute.xlu0 %569
    %v572 = vmul.f32 %v566, %v570
    %574 = vrot.lane.b32.xlu0 %v572, 32
    %v575 = vpop.permute.xlu0 %574
    %v577 = vadd.f32 %v567, %v575
    %v578 = vtanh.pop %v577
    %580 = vrot.lane.b32.xlu0 %v578, 64
    %v581 = vpop.permute.xlu0 %580
    %v583 = vmul.f32 %v566, %v581
    %584 = vmatpush.msra.mxu0 0.0
    %585 = vmatpush.msra.mxu0 0.0
    %586 = vmatpush.msra.mxu0 0.0
    %587 = vmatpush.msra.mxu0 0.0
    %588 = vmatpush.msra.mxu0 0.0
    %589 = vmatpush.msra.mxu0 0.0
    %590 = vmatpush.msra.mxu0 0.0
    %591 = vmatpush.msra.mxu0 0.0
    %592 = vmatpush.msra.mxu0 0.0
    %593 = vmatpush.msra.mxu0 0.0
    %594 = vmatpush.msra.mxu0 0.0
    %595 = vmatpush.msra.mxu0 0.0
    %596 = vmatpush.msra.mxu0 %v114
    %597 = vmatpush.msra.mxu0 %v113
    %598 = vmatpush.msra.mxu0 %v112
    %599 = vmatpush.msra.mxu0 %v111
    %600 = vmatmul.f32.gmra.mxu0 %v523
    %v601 = vpop.f32.mrf.mxu0
    %v602 = vadd.f32 0.0, %v601
    %603 = vdwg.mxu0
    %v605 = vrot.slane %v602, 2
    %v607 = vadd.f32 %v106, %v605
    %v608 = vxor.u32 %v607, 2147483648
    %v609 = vmul.f32 %v608, 1.442695
    %v610 = vpow.pop %v609
    %v611 = vadd.f32 %v610, 1.0
    %v612 = vrcp.pop %v611
    %v613 = vmul.f32 %v611, %v612
    %v614 = vsub.f32 1.0, %v613
    %v615 = vmul.f32 %v612, %v614
    %v616 = vadd.f32 %v612, %v615
    %vm617 = vweird.f32 %v611
    %vm618 = vweird.f32 %v612
    %vm619 = vmor %vm617, %vm618
    %v620 = vsel %vm619, %v612, %v616
    %v621 = vand.u32 2147483647, %v611
    %vm622 = vcmp.eq.f32.partialorder %v621, 8.507059e+37
    %v623 = vand.u32 %v611, 2147483648
    %v624 = vor.u32 1.1754944e-38, %v623
    %v625 = vsel %vm622, %v624, %v620
    %v626 = vmul.f32 1.0, %v625
    %v627 = vtanh.pop %v607
    %v628 = vsel %vm69, %v627, %v626
    %v630 = vrot.slane %v487, 6
    %v632 = vmul.f32 %v628, %v630
    %634 = vrot.lane.b32.xlu0 %v628, 64
    %v635 = vpop.permute.xlu0 %634
    %v637 = vmul.f32 %v628, %v635
    %639 = vrot.lane.b32.xlu0 %v637, 32
    %v640 = vpop.permute.xlu0 %639
    %v642 = vadd.f32 %v632, %v640
    %v643 = vtanh.pop %v642
    %645 = vrot.lane.b32.xlu0 %v643, 64
    %v646 = vpop.permute.xlu0 %645
    %v648 = vmul.f32 %v628, %v646
    %650 = vrot.lane.b32.xlu0 %v583, 32
    %v651 = vpop.permute.xlu0 %650
    %v652 = vsel %vm127, %v651, 0
    %654 = vmatpush.msra.mxu0 0.0
    %655 = vmatpush.msra.mxu0 0.0
    %656 = vmatpush.msra.mxu0 0.0
    %657 = vmatpush.msra.mxu0 0.0
    %658 = vmatpush.msra.mxu0 0.0
    %659 = vmatpush.msra.mxu0 0.0
    %660 = vmatpush.msra.mxu0 0.0
    %661 = vmatpush.msra.mxu0 0.0
    %662 = vmatpush.msra.mxu0 0.0
    %663 = vmatpush.msra.mxu0 0.0
    %664 = vmatpush.msra.mxu0 0.0
    %665 = vmatpush.msra.mxu0 0.0
    %666 = vmatpush.msra.mxu0 %v122
    %667 = vmatpush.msra.mxu0 %v121
    %668 = vmatpush.msra.mxu0 %v120
    %669 = vmatpush.msra.mxu0 %v119
    %670 = vmatmul.f32.gmra.mxu0 %v652
    %v671 = vpop.f32.mrf.mxu0
    %v672 = vadd.f32 0.0, %v671
    %673 = vdwg.mxu0
    %v675 = vrot.slane %v648, 6
    %676 = vrot.lane.b32.xlu0 %v675, 32
    %v677 = vpop.permute.xlu0 %676
    %v678 = vsel %vm127, %v677, 0
    %680 = vmatpush.msra.mxu0 0.0
    %681 = vmatpush.msra.mxu0 0.0
    %682 = vmatpush.msra.mxu0 0.0
    %683 = vmatpush.msra.mxu0 0.0
    %684 = vmatpush.msra.mxu0 0.0
    %685 = vmatpush.msra.mxu0 0.0
    %686 = vmatpush.msra.mxu0 0.0
    %687 = vmatpush.msra.mxu0 0.0
    %688 = vmatpush.msra.mxu0 0.0
    %689 = vmatpush.msra.mxu0 0.0
    %690 = vmatpush.msra.mxu0 0.0
    %691 = vmatpush.msra.mxu0 0.0
    %692 = vmatpush.msra.mxu0 %v118
    %693 = vmatpush.msra.mxu0 %v117
    %694 = vmatpush.msra.mxu0 %v116
    %695 = vmatpush.msra.mxu0 %v115
    %696 = vmatmul.f32.gmra.mxu0 %v678
    %v697 = vpop.f32.mrf.mxu0
    %v698 = vadd.f32 %v672, %v697
    %699 = vdwg.mxu0
    %v700 = vadd.f32 %v698, %v125
    %v701 = vxor.u32 %v700, 2147483648
    %v702 = vmul.f32 %v701, 1.442695
    %v703 = vpow.pop %v702
    %v704 = vadd.f32 %v703, 1.0
    %v705 = vrcp.pop %v704
    %v706 = vmul.f32 %v704, %v705
    %v707 = vsub.f32 1.0, %v706
    %v708 = vmul.f32 %v705, %v707
    %v709 = vadd.f32 %v705, %v708
    %vm710 = vweird.f32 %v704
    %vm711 = vweird.f32 %v705
    %vm712 = vmor %vm710, %vm711
    %v713 = vsel %vm712, %v705, %v709
    %v714 = vand.u32 2147483647, %v704
    %vm715 = vcmp.eq.f32.partialorder %v714, 8.507059e+37
    %v716 = vand.u32 %v704, 2147483648
    %v717 = vor.u32 1.1754944e-38, %v716
    %v718 = vsel %vm715, %v717, %v713
    %v719 = vmul.f32 1.0, %v718
    %v720 = vtanh.pop %v700
    %v721 = vsel %vm69, %v720, %v719
    %v722 = vmul.f32 %v721, %v577
    %724 = vrot.lane.b32.xlu0 %v721, 64
    %v725 = vpop.permute.xlu0 %724
    %v727 = vmul.f32 %v721, %v725
    %729 = vrot.lane.b32.xlu0 %v727, 32
    %v730 = vpop.permute.xlu0 %729
    %v732 = vadd.f32 %v722, %v730
    %v733 = vtanh.pop %v732
    %735 = vrot.lane.b32.xlu0 %v733, 64
    %v736 = vpop.permute.xlu0 %735
    %v738 = vmul.f32 %v721, %v736
    %739 = vmatpush.msra.mxu0 0.0
    %740 = vmatpush.msra.mxu0 0.0
    %741 = vmatpush.msra.mxu0 0.0
    %742 = vmatpush.msra.mxu0 0.0
    %743 = vmatpush.msra.mxu0 0.0
    %744 = vmatpush.msra.mxu0 0.0
    %745 = vmatpush.msra.mxu0 0.0
    %746 = vmatpush.msra.mxu0 0.0
    %747 = vmatpush.msra.mxu0 0.0
    %748 = vmatpush.msra.mxu0 0.0
    %749 = vmatpush.msra.mxu0 0.0
    %750 = vmatpush.msra.mxu0 0.0
    %751 = vmatpush.msra.mxu0 %v114
    %752 = vmatpush.msra.mxu0 %v113
    %753 = vmatpush.msra.mxu0 %v112
    %754 = vmatpush.msra.mxu0 %v111
    %755 = vmatmul.f32.gmra.mxu0 %v678
    %v756 = vpop.f32.mrf.mxu0
    %v757 = vadd.f32 0.0, %v756
    %758 = vdwg.mxu0
    %v759 = vadd.f32 %v109, %v757
    %v760 = vxor.u32 %v759, 2147483648
    %v761 = vmul.f32 %v760, 1.442695
    %v762 = vpow.pop %v761
    %v763 = vadd.f32 %v762, 1.0
    %v764 = vrcp.pop %v763
    %v765 = vmul.f32 %v763, %v764
    %v766 = vsub.f32 1.0, %v765
    %v767 = vmul.f32 %v764, %v766
    %v768 = vadd.f32 %v764, %v767
    %vm769 = vweird.f32 %v763
    %vm770 = vweird.f32 %v764
    %vm771 = vmor %vm769, %vm770
    %v772 = vsel %vm771, %v764, %v768
    %v773 = vand.u32 2147483647, %v763
    %vm774 = vcmp.eq.f32.partialorder %v773, 8.507059e+37
    %v775 = vand.u32 %v763, 2147483648
    %v776 = vor.u32 1.1754944e-38, %v775
    %v777 = vsel %vm774, %v776, %v772
    %v778 = vmul.f32 1.0, %v777
    %v779 = vtanh.pop %v759
    %v780 = vsel %vm69, %v779, %v778
    %v782 = vrot.slane %v642, 6
    %v784 = vmul.f32 %v780, %v782
    %786 = vrot.lane.b32.xlu0 %v780, 64
    %v787 = vpop.permute.xlu0 %786
    %v789 = vmul.f32 %v780, %v787
    %791 = vrot.lane.b32.xlu0 %v789, 32
    %v792 = vpop.permute.xlu0 %791
    %v794 = vadd.f32 %v784, %v792
    %v795 = vtanh.pop %v794
    %797 = vrot.lane.b32.xlu0 %v795, 64
    %v798 = vpop.permute.xlu0 %797
    %v800 = vmul.f32 %v780, %v798
    %802 = vrot.lane.b32.xlu0 %v738, 32
    %v803 = vpop.permute.xlu0 %802
    %v804 = vsel %vm127, %v803, 0
    %806 = vmatpush.msra.mxu0 0.0
    %807 = vmatpush.msra.mxu0 0.0
    %808 = vmatpush.msra.mxu0 0.0
    %809 = vmatpush.msra.mxu0 0.0
    %810 = vmatpush.msra.mxu0 0.0
    %811 = vmatpush.msra.mxu0 0.0
    %812 = vmatpush.msra.mxu0 0.0
    %813 = vmatpush.msra.mxu0 0.0
    %814 = vmatpush.msra.mxu0 0.0
    %815 = vmatpush.msra.mxu0 0.0
    %816 = vmatpush.msra.mxu0 0.0
    %817 = vmatpush.msra.mxu0 0.0
    %818 = vmatpush.msra.mxu0 %v122
    %819 = vmatpush.msra.mxu0 %v121
    %820 = vmatpush.msra.mxu0 %v120
    %821 = vmatpush.msra.mxu0 %v119
    %822 = vmatmul.f32.gmra.mxu0 %v804
    %v823 = vpop.f32.mrf.mxu0
    %v824 = vadd.f32 0.0, %v823
    %825 = vdwg.mxu0
    %827 = vrot.lane.b32.xlu0 %v800, 32
    %v828 = vpop.permute.xlu0 %827
    %v829 = vsel %vm127, %v828, 0
    %831 = vmatpush.msra.mxu0 0.0
    %832 = vmatpush.msra.mxu0 0.0
    %833 = vmatpush.msra.mxu0 0.0
    %834 = vmatpush.msra.mxu0 0.0
    %835 = vmatpush.msra.mxu0 0.0
    %836 = vmatpush.msra.mxu0 0.0
    %837 = vmatpush.msra.mxu0 0.0
    %838 = vmatpush.msra.mxu0 0.0
    %839 = vmatpush.msra.mxu0 0.0
    %840 = vmatpush.msra.mxu0 0.0
    %841 = vmatpush.msra.mxu0 0.0
    %842 = vmatpush.msra.mxu0 0.0
    %843 = vmatpush.msra.mxu0 %v118
    %844 = vmatpush.msra.mxu0 %v117
    %845 = vmatpush.msra.mxu0 %v116
    %846 = vmatpush.msra.mxu0 %v115
    %847 = vmatmul.f32.gmra.mxu0 %v829
    %v848 = vpop.f32.mrf.mxu0
    %v849 = vadd.f32 %v824, %v848
    %850 = vdwg.mxu0
    %v851 = vadd.f32 %v849, %v125
    %v852 = vxor.u32 %v851, 2147483648
    %v853 = vmul.f32 %v852, 1.442695
    %v854 = vpow.pop %v853
    %v855 = vadd.f32 %v854, 1.0
    %v856 = vrcp.pop %v855
    %v857 = vmul.f32 %v855, %v856
    %v858 = vsub.f32 1.0, %v857
    %v859 = vmul.f32 %v856, %v858
    %v860 = vadd.f32 %v856, %v859
    %vm861 = vweird.f32 %v855
    %vm862 = vweird.f32 %v856
    %vm863 = vmor %vm861, %vm862
    %v864 = vsel %vm863, %v856, %v860
    %v865 = vand.u32 2147483647, %v855
    %vm866 = vcmp.eq.f32.partialorder %v865, 8.507059e+37
    %v867 = vand.u32 %v855, 2147483648
    %v868 = vor.u32 1.1754944e-38, %v867
    %v869 = vsel %vm866, %v868, %v864
    %v870 = vmul.f32 1.0, %v869
    %v871 = vtanh.pop %v851
    %v872 = vsel %vm69, %v871, %v870
    %v873 = vmul.f32 %v872, %v732
    %875 = vrot.lane.b32.xlu0 %v872, 64
    %v876 = vpop.permute.xlu0 %875
    %v878 = vmul.f32 %v872, %v876
    %880 = vrot.lane.b32.xlu0 %v878, 32
    %v881 = vpop.permute.xlu0 %880
    %v883 = vadd.f32 %v873, %v881
    %v884 = vtanh.pop %v883
    %886 = vrot.lane.b32.xlu0 %v884, 64
    %v887 = vpop.permute.xlu0 %886
    %v889 = vmul.f32 %v872, %v887
    %890 = vmatpush.msra.mxu0 0.0
    %891 = vmatpush.msra.mxu0 0.0
    %892 = vmatpush.msra.mxu0 0.0
    %893 = vmatpush.msra.mxu0 0.0
    %894 = vmatpush.msra.mxu0 0.0
    %895 = vmatpush.msra.mxu0 0.0
    %896 = vmatpush.msra.mxu0 0.0
    %897 = vmatpush.msra.mxu0 0.0
    %898 = vmatpush.msra.mxu0 0.0
    %899 = vmatpush.msra.mxu0 0.0
    %900 = vmatpush.msra.mxu0 0.0
    %901 = vmatpush.msra.mxu0 0.0
    %902 = vmatpush.msra.mxu0 %v114
    %903 = vmatpush.msra.mxu0 %v113
    %904 = vmatpush.msra.mxu0 %v112
    %905 = vmatpush.msra.mxu0 %v111
    %906 = vmatmul.f32.gmra.mxu0 %v829
    %v907 = vpop.f32.mrf.mxu0
    %v908 = vadd.f32 0.0, %v907
    %909 = vdwg.mxu0
    %v911 = vrot.slane %v908, 6
    %v913 = vadd.f32 %v109, %v911
    %v914 = vxor.u32 %v913, 2147483648
    %v915 = vmul.f32 %v914, 1.442695
    %v916 = vpow.pop %v915
    %v917 = vadd.f32 %v916, 1.0
    %v918 = vrcp.pop %v917
    %v919 = vmul.f32 %v917, %v918
    %v920 = vsub.f32 1.0, %v919
    %v921 = vmul.f32 %v918, %v920
    %v922 = vadd.f32 %v918, %v921
    %vm923 = vweird.f32 %v917
    %vm924 = vweird.f32 %v918
    %vm925 = vmor %vm923, %vm924
    %v926 = vsel %vm925, %v918, %v922
    %v927 = vand.u32 2147483647, %v917
    %vm928 = vcmp.eq.f32.partialorder %v927, 8.507059e+37
    %v929 = vand.u32 %v917, 2147483648
    %v930 = vor.u32 1.1754944e-38, %v929
    %v931 = vsel %vm928, %v930, %v926
    %v932 = vmul.f32 1.0, %v931
    %v933 = vtanh.pop %v913
    %v934 = vsel %vm69, %v933, %v932
    %v936 = vrot.slane %v794, 6
    %v938 = vmul.f32 %v934, %v936
    %940 = vrot.lane.b32.xlu0 %v934, 64
    %v941 = vpop.permute.xlu0 %940
    %v943 = vmul.f32 %v934, %v941
    %945 = vrot.lane.b32.xlu0 %v943, 32
    %v946 = vpop.permute.xlu0 %945
    %v948 = vadd.f32 %v938, %v946
    %v949 = vtanh.pop %v948
    %951 = vrot.lane.b32.xlu0 %v949, 64
    %v952 = vpop.permute.xlu0 %951
    %v954 = vmul.f32 %v934, %v952
    %956 = vrot.lane.b32.xlu0 %v889, 32
    %v957 = vpop.permute.xlu0 %956
    %v958 = vsel %vm127, %v957, 0
    %960 = vmatpush.msra.mxu0 0.0
    %961 = vmatpush.msra.mxu0 0.0
    %962 = vmatpush.msra.mxu0 0.0
    %963 = vmatpush.msra.mxu0 0.0
    %964 = vmatpush.msra.mxu0 0.0
    %965 = vmatpush.msra.mxu0 0.0
    %966 = vmatpush.msra.mxu0 0.0
    %967 = vmatpush.msra.mxu0 0.0
    %968 = vmatpush.msra.mxu0 0.0
    %969 = vmatpush.msra.mxu0 0.0
    %970 = vmatpush.msra.mxu0 0.0
    %971 = vmatpush.msra.mxu0 0.0
    %972 = vmatpush.msra.mxu0 %v122
    %973 = vmatpush.msra.mxu0 %v121
    %974 = vmatpush.msra.mxu0 %v120
    %975 = vmatpush.msra.mxu0 %v119
    %976 = vmatmul.f32.gmra.mxu0 %v958
    %v977 = vpop.f32.mrf.mxu0
    %v978 = vadd.f32 0.0, %v977
    %979 = vdwg.mxu0
    %v981 = vrot.slane %v954, 2
    %982 = vrot.lane.b32.xlu0 %v981, 32
    %v983 = vpop.permute.xlu0 %982
    %v984 = vsel %vm127, %v983, 0
    %986 = vmatpush.msra.mxu0 0.0
    %987 = vmatpush.msra.mxu0 0.0
    %988 = vmatpush.msra.mxu0 0.0
    %989 = vmatpush.msra.mxu0 0.0
    %990 = vmatpush.msra.mxu0 0.0
    %991 = vmatpush.msra.mxu0 0.0
    %992 = vmatpush.msra.mxu0 0.0
    %993 = vmatpush.msra.mxu0 0.0
    %994 = vmatpush.msra.mxu0 0.0
    %995 = vmatpush.msra.mxu0 0.0
    %996 = vmatpush.msra.mxu0 0.0
    %997 = vmatpush.msra.mxu0 0.0
    %998 = vmatpush.msra.mxu0 %v118
    %999 = vmatpush.msra.mxu0 %v117
    %1000 = vmatpush.msra.mxu0 %v116
    %1001 = vmatpush.msra.mxu0 %v115
    %1002 = vmatmul.f32.gmra.mxu0 %v984
    %v1003 = vpop.f32.mrf.mxu0
    %v1004 = vadd.f32 %v978, %v1003
    %1005 = vdwg.mxu0
    %v1006 = vadd.f32 %v1004, %v125
    %v1007 = vxor.u32 %v1006, 2147483648
    %v1008 = vmul.f32 %v1007, 1.442695
    %v1009 = vpow.pop %v1008
    %v1010 = vadd.f32 %v1009, 1.0
    %v1011 = vrcp.pop %v1010
    %v1012 = vmul.f32 %v1010, %v1011
    %v1013 = vsub.f32 1.0, %v1012
    %v1014 = vmul.f32 %v1011, %v1013
    %v1015 = vadd.f32 %v1011, %v1014
    %vm1016 = vweird.f32 %v1010
    %vm1017 = vweird.f32 %v1011
    %vm1018 = vmor %vm1016, %vm1017
    %v1019 = vsel %vm1018, %v1011, %v1015
    %v1020 = vand.u32 2147483647, %v1010
    %vm1021 = vcmp.eq.f32.partialorder %v1020, 8.507059e+37
    %v1022 = vand.u32 %v1010, 2147483648
    %v1023 = vor.u32 1.1754944e-38, %v1022
    %v1024 = vsel %vm1021, %v1023, %v1019
    %v1025 = vmul.f32 1.0, %v1024
    %v1026 = vtanh.pop %v1006
    %v1027 = vsel %vm69, %v1026, %v1025
    %v1028 = vmul.f32 %v1027, %v883
    %1030 = vrot.lane.b32.xlu0 %v1027, 64
    %v1031 = vpop.permute.xlu0 %1030
    %v1033 = vmul.f32 %v1027, %v1031
    %1035 = vrot.lane.b32.xlu0 %v1033, 32
    %v1036 = vpop.permute.xlu0 %1035
    %v1038 = vadd.f32 %v1028, %v1036
    %v1039 = vtanh.pop %v1038
    %1041 = vrot.lane.b32.xlu0 %v1039, 64
    %v1042 = vpop.permute.xlu0 %1041
    %v1044 = vmul.f32 %v1027, %v1042
    %1045 = vmatpush.msra.mxu0 0.0
    %1046 = vmatpush.msra.mxu0 0.0
    %1047 = vmatpush.msra.mxu0 0.0
    %1048 = vmatpush.msra.mxu0 0.0
    %1049 = vmatpush.msra.mxu0 0.0
    %1050 = vmatpush.msra.mxu0 0.0
    %1051 = vmatpush.msra.mxu0 0.0
    %1052 = vmatpush.msra.mxu0 0.0
    %1053 = vmatpush.msra.mxu0 0.0
    %1054 = vmatpush.msra.mxu0 0.0
    %1055 = vmatpush.msra.mxu0 0.0
    %1056 = vmatpush.msra.mxu0 0.0
    %1057 = vmatpush.msra.mxu0 %v114
    %1058 = vmatpush.msra.mxu0 %v113
    %1059 = vmatpush.msra.mxu0 %v112
    %1060 = vmatpush.msra.mxu0 %v111
    %1061 = vmatmul.f32.gmra.mxu0 %v984
    %v1062 = vpop.f32.mrf.mxu0
    %v1063 = vadd.f32 0.0, %v1062
    %1064 = vdwg.mxu0
    %v1066 = vrot.slane %v1063, 4
    %v1068 = vadd.f32 %v109, %v1066
    %v1069 = vxor.u32 %v1068, 2147483648
    %v1070 = vmul.f32 %v1069, 1.442695
    %v1071 = vpow.pop %v1070
    %v1072 = vadd.f32 %v1071, 1.0
    %v1073 = vrcp.pop %v1072
    %v1074 = vmul.f32 %v1072, %v1073
    %v1075 = vsub.f32 1.0, %v1074
    %v1076 = vmul.f32 %v1073, %v1075
    %v1077 = vadd.f32 %v1073, %v1076
    %vm1078 = vweird.f32 %v1072
    %vm1079 = vweird.f32 %v1073
    %vm1080 = vmor %vm1078, %vm1079
    %v1081 = vsel %vm1080, %v1073, %v1077
    %v1082 = vand.u32 2147483647, %v1072
    %vm1083 = vcmp.eq.f32.partialorder %v1082, 8.507059e+37
    %v1084 = vand.u32 %v1072, 2147483648
    %v1085 = vor.u32 1.1754944e-38, %v1084
    %v1086 = vsel %vm1083, %v1085, %v1081
    %v1087 = vmul.f32 1.0, %v1086
    %v1088 = vtanh.pop %v1068
    %v1089 = vsel %vm69, %v1088, %v1087
    %v1091 = vrot.slane %v948, 6
    %v1093 = vmul.f32 %v1089, %v1091
    %1095 = vrot.lane.b32.xlu0 %v1089, 64
    %v1096 = vpop.permute.xlu0 %1095
    %v1098 = vmul.f32 %v1089, %v1096
    %1100 = vrot.lane.b32.xlu0 %v1098, 32
    %v1101 = vpop.permute.xlu0 %1100
    %v1103 = vadd.f32 %v1093, %v1101
    %v1104 = vtanh.pop %v1103
    %1106 = vrot.lane.b32.xlu0 %v1104, 64
    %v1107 = vpop.permute.xlu0 %1106
    %v1109 = vmul.f32 %v1089, %v1107
    %1111 = vrot.lane.b32.xlu0 %v1044, 32
    %v1112 = vpop.permute.xlu0 %1111
    %v1113 = vsel %vm127, %v1112, 0
    %1115 = vmatpush.msra.mxu0 0.0
    %1116 = vmatpush.msra.mxu0 0.0
    %1117 = vmatpush.msra.mxu0 0.0
    %1118 = vmatpush.msra.mxu0 0.0
    %1119 = vmatpush.msra.mxu0 0.0
    %1120 = vmatpush.msra.mxu0 0.0
    %1121 = vmatpush.msra.mxu0 0.0
    %1122 = vmatpush.msra.mxu0 0.0
    %1123 = vmatpush.msra.mxu0 0.0
    %1124 = vmatpush.msra.mxu0 0.0
    %1125 = vmatpush.msra.mxu0 0.0
    %1126 = vmatpush.msra.mxu0 0.0
    %1127 = vmatpush.msra.mxu0 %v122
    %1128 = vmatpush.msra.mxu0 %v121
    %1129 = vmatpush.msra.mxu0 %v120
    %1130 = vmatpush.msra.mxu0 %v119
    %1131 = vmatmul.f32.gmra.mxu0 %v1113
    %v1132 = vpop.f32.mrf.mxu0
    %v1133 = vadd.f32 0.0, %v1132
    %1134 = vdwg.mxu0
    %v1136 = vrot.slane %v1109, 4
    %1137 = vrot.lane.b32.xlu0 %v1136, 32
    %v1138 = vpop.permute.xlu0 %1137
    %v1139 = vsel %vm127, %v1138, 0
    %1141 = vmatpush.msra.mxu0 0.0
    %1142 = vmatpush.msra.mxu0 0.0
    %1143 = vmatpush.msra.mxu0 0.0
    %1144 = vmatpush.msra.mxu0 0.0
    %1145 = vmatpush.msra.mxu0 0.0
    %1146 = vmatpush.msra.mxu0 0.0
    %1147 = vmatpush.msra.mxu0 0.0
    %1148 = vmatpush.msra.mxu0 0.0
    %1149 = vmatpush.msra.mxu0 0.0
    %1150 = vmatpush.msra.mxu0 0.0
    %1151 = vmatpush.msra.mxu0 0.0
    %1152 = vmatpush.msra.mxu0 0.0
    %1153 = vmatpush.msra.mxu0 %v118
    %1154 = vmatpush.msra.mxu0 %v117
    %1155 = vmatpush.msra.mxu0 %v116
    %1156 = vmatpush.msra.mxu0 %v115
    %1157 = vmatmul.f32.gmra.mxu0 %v1139
    %v1158 = vpop.f32.mrf.mxu0
    %v1159 = vadd.f32 %v1133, %v1158
    %1160 = vdwg.mxu0
    %v1161 = vadd.f32 %v1159, %v125
    %v1162 = vxor.u32 %v1161, 2147483648
    %v1163 = vmul.f32 %v1162, 1.442695
    %v1164 = vpow.pop %v1163
    %v1165 = vadd.f32 %v1164, 1.0
    %v1166 = vrcp.pop %v1165
    %v1167 = vmul.f32 %v1165, %v1166
    %v1168 = vsub.f32 1.0, %v1167
    %v1169 = vmul.f32 %v1166, %v1168
    %v1170 = vadd.f32 %v1166, %v1169
    %vm1171 = vweird.f32 %v1165
    %vm1172 = vweird.f32 %v1166
    %vm1173 = vmor %vm1171, %vm1172
    %v1174 = vsel %vm1173, %v1166, %v1170
    %v1175 = vand.u32 2147483647, %v1165
    %vm1176 = vcmp.eq.f32.partialorder %v1175, 8.507059e+37
    %v1177 = vand.u32 %v1165, 2147483648
    %v1178 = vor.u32 1.1754944e-38, %v1177
    %v1179 = vsel %vm1176, %v1178, %v1174
    %v1180 = vmul.f32 1.0, %v1179
    %v1181 = vtanh.pop %v1161
    %v1182 = vsel %vm69, %v1181, %v1180
    %v1183 = vmul.f32 %v1182, %v1038
    %1185 = vrot.lane.b32.xlu0 %v1182, 64
    %v1186 = vpop.permute.xlu0 %1185
    %v1188 = vmul.f32 %v1182, %v1186
    %1190 = vrot.lane.b32.xlu0 %v1188, 32
    %v1191 = vpop.permute.xlu0 %1190
    %v1193 = vadd.f32 %v1183, %v1191
    %v1194 = vtanh.pop %v1193
    %1196 = vrot.lane.b32.xlu0 %v1194, 64
    %v1197 = vpop.permute.xlu0 %1196
    %v1199 = vmul.f32 %v1182, %v1197
    %1200 = vmatpush.msra.mxu0 0.0
    %1201 = vmatpush.msra.mxu0 0.0
    %1202 = vmatpush.msra.mxu0 0.0
    %1203 = vmatpush.msra.mxu0 0.0
    %1204 = vmatpush.msra.mxu0 0.0
    %1205 = vmatpush.msra.mxu0 0.0
    %1206 = vmatpush.msra.mxu0 0.0
    %1207 = vmatpush.msra.mxu0 0.0
    %1208 = vmatpush.msra.mxu0 0.0
    %1209 = vmatpush.msra.mxu0 0.0
    %1210 = vmatpush.msra.mxu0 0.0
    %1211 = vmatpush.msra.mxu0 0.0
    %1212 = vmatpush.msra.mxu0 %v114
    %1213 = vmatpush.msra.mxu0 %v113
    %1214 = vmatpush.msra.mxu0 %v112
    %1215 = vmatpush.msra.mxu0 %v111
    %1216 = vmatmul.f32.gmra.mxu0 %v1139
    %v1217 = vpop.f32.mrf.mxu0
    %v1218 = vadd.f32 0.0, %v1217
    %1219 = vdwg.mxu0
    %v1221 = vrot.slane %v1218, 2
    %v1223 = vadd.f32 %v109, %v1221
    %v1224 = vxor.u32 %v1223, 2147483648
    %v1225 = vmul.f32 %v1224, 1.442695
    %v1226 = vpow.pop %v1225
    %v1227 = vadd.f32 %v1226, 1.0
    %v1228 = vrcp.pop %v1227
    %v1229 = vmul.f32 %v1227, %v1228
    %v1230 = vsub.f32 1.0, %v1229
    %v1231 = vmul.f32 %v1228, %v1230
    %v1232 = vadd.f32 %v1228, %v1231
    %vm1233 = vweird.f32 %v1227
    %vm1234 = vweird.f32 %v1228
    %vm1235 = vmor %vm1233, %vm1234
    %v1236 = vsel %vm1235, %v1228, %v1232
    %v1237 = vand.u32 2147483647, %v1227
    %vm1238 = vcmp.eq.f32.partialorder %v1237, 8.507059e+37
    %v1239 = vand.u32 %v1227, 2147483648
    %v1240 = vor.u32 1.1754944e-38, %v1239
    %v1241 = vsel %vm1238, %v1240, %v1236
    %v1242 = vmul.f32 1.0, %v1241
    %v1243 = vtanh.pop %v1223
    %v1244 = vsel %vm69, %v1243, %v1242
    %v1246 = vrot.slane %v1103, 6
    %v1248 = vmul.f32 %v1244, %v1246
    %1250 = vrot.lane.b32.xlu0 %v1244, 64
    %v1251 = vpop.permute.xlu0 %1250
    %v1253 = vmul.f32 %v1244, %v1251
    %1255 = vrot.lane.b32.xlu0 %v1253, 32
    %v1256 = vpop.permute.xlu0 %1255
    %v1258 = vadd.f32 %v1248, %v1256
    %v1259 = vtanh.pop %v1258
    %1261 = vrot.lane.b32.xlu0 %v1259, 64
    %v1262 = vpop.permute.xlu0 %1261
    %v1264 = vmul.f32 %v1244, %v1262
    %1266 = vrot.lane.b32.xlu0 %v1199, 32
    %v1267 = vpop.permute.xlu0 %1266
    %v1268 = vsel %vm127, %v1267, 0
    %1270 = vmatpush.msra.mxu0 0.0
    %1271 = vmatpush.msra.mxu0 0.0
    %1272 = vmatpush.msra.mxu0 0.0
    %1273 = vmatpush.msra.mxu0 0.0
    %1274 = vmatpush.msra.mxu0 0.0
    %1275 = vmatpush.msra.mxu0 0.0
    %1276 = vmatpush.msra.mxu0 0.0
    %1277 = vmatpush.msra.mxu0 0.0
    %1278 = vmatpush.msra.mxu0 0.0
    %1279 = vmatpush.msra.mxu0 0.0
    %1280 = vmatpush.msra.mxu0 0.0
    %1281 = vmatpush.msra.mxu0 0.0
    %1282 = vmatpush.msra.mxu0 %v122
    %1283 = vmatpush.msra.mxu0 %v121
    %1284 = vmatpush.msra.mxu0 %v120
    %1285 = vmatpush.msra.mxu0 %v119
    %1286 = vmatmul.f32.gmra.mxu0 %v1268
    %v1287 = vpop.f32.mrf.mxu0
    %v1288 = vadd.f32 0.0, %v1287
    %1289 = vdwg.mxu0
    %v1291 = vrot.slane %v1264, 6
    %1292 = vrot.lane.b32.xlu0 %v1291, 32
    %v1293 = vpop.permute.xlu0 %1292
    %v1294 = vsel %vm127, %v1293, 0
    %1296 = vmatpush.msra.mxu0 0.0
    %1297 = vmatpush.msra.mxu0 0.0
    %1298 = vmatpush.msra.mxu0 0.0
    %1299 = vmatpush.msra.mxu0 0.0
    %1300 = vmatpush.msra.mxu0 0.0
    %1301 = vmatpush.msra.mxu0 0.0
    %1302 = vmatpush.msra.mxu0 0.0
    %1303 = vmatpush.msra.mxu0 0.0
    %1304 = vmatpush.msra.mxu0 0.0
    %1305 = vmatpush.msra.mxu0 0.0
    %1306 = vmatpush.msra.mxu0 0.0
    %1307 = vmatpush.msra.mxu0 0.0
    %1308 = vmatpush.msra.mxu0 %v118
    %1309 = vmatpush.msra.mxu0 %v117
    %1310 = vmatpush.msra.mxu0 %v116
    %1311 = vmatpush.msra.mxu0 %v115
    %1312 = vmatmul.f32.gmra.mxu0 %v1294
    %v1313 = vpop.f32.mrf.mxu0
    %v1314 = vadd.f32 %v1288, %v1313
    %1315 = vdwg.mxu0
    %v1316 = vadd.f32 %v1314, %v125
    %v1317 = vxor.u32 %v1316, 2147483648
    %v1318 = vmul.f32 %v1317, 1.442695
    %v1319 = vpow.pop %v1318
    %v1320 = vadd.f32 %v1319, 1.0
    %v1321 = vrcp.pop %v1320
    %v1322 = vmul.f32 %v1320, %v1321
    %v1323 = vsub.f32 1.0, %v1322
    %v1324 = vmul.f32 %v1321, %v1323
    %v1325 = vadd.f32 %v1321, %v1324
    %vm1326 = vweird.f32 %v1320
    %vm1327 = vweird.f32 %v1321
    %vm1328 = vmor %vm1326, %vm1327
    %v1329 = vsel %vm1328, %v1321, %v1325
    %v1330 = vand.u32 2147483647, %v1320
    %vm1331 = vcmp.eq.f32.partialorder %v1330, 8.507059e+37
    %v1332 = vand.u32 %v1320, 2147483648
    %v1333 = vor.u32 1.1754944e-38, %v1332
    %v1334 = vsel %vm1331, %v1333, %v1329
    %v1335 = vmul.f32 1.0, %v1334
    %v1336 = vtanh.pop %v1316
    %v1337 = vsel %vm69, %v1336, %v1335
    %v1338 = vmul.f32 %v1337, %v1193
    %1340 = vrot.lane.b32.xlu0 %v1337, 64
    %v1341 = vpop.permute.xlu0 %1340
    %v1343 = vmul.f32 %v1337, %v1341
    %1345 = vrot.lane.b32.xlu0 %v1343, 32
    %v1346 = vpop.permute.xlu0 %1345
    %v1348 = vadd.f32 %v1338, %v1346
    %v1349 = vtanh.pop %v1348
    %1351 = vrot.lane.b32.xlu0 %v1349, 64
    %v1352 = vpop.permute.xlu0 %1351
    %v1354 = vmul.f32 %v1337, %v1352
    %v1355 = vld [vmem:[%s7] sm:$0xff]
    %v1356 = vld [vmem:[%s7 + $0x8] sm:$0xff]
    %v1357 = vld [vmem:[%s7 + $0x10] sm:$0xff]
    %v1358 = vld [vmem:[%s7 + $0x18] sm:$0xff]
    %v1359 = vld [vmem:[%s8] sm:$0x1]
    %v1361 = vperm.slane %v1359, 0
    %1364 = vrot.lane.b32.xlu0 %v1354, 32
    %v1365 = vpop.permute.xlu0 %1364
    %v1366 = vsel %vm127, %v1365, 0
    %1368 = vmatpush.msra.mxu0 0.0
    %1369 = vmatpush.msra.mxu0 0.0
    %1370 = vmatpush.msra.mxu0 0.0
    %1371 = vmatpush.msra.mxu0 0.0
    %1372 = vmatpush.msra.mxu0 0.0
    %1373 = vmatpush.msra.mxu0 0.0
    %1374 = vmatpush.msra.mxu0 0.0
    %1375 = vmatpush.msra.mxu0 0.0
    %1376 = vmatpush.msra.mxu0 0.0
    %1377 = vmatpush.msra.mxu0 0.0
    %1378 = vmatpush.msra.mxu0 0.0
    %1379 = vmatpush.msra.mxu0 0.0
    %1380 = vmatpush.msra.mxu0 %v1358
    %1381 = vmatpush.msra.mxu0 %v1357
    %1382 = vmatpush.msra.mxu0 %v1356
    %1383 = vmatpush.msra.mxu0 %v1355
    %1384 = vmatmul.f32.gmra.mxu0 %v1366
    %v1385 = vpop.f32.mrf.mxu0
    %v1386 = vadd.f32 %v1361, %v1385
    %1387 = vdwg.mxu0
    %vm1388 = vcmask 17408
    %1389 = vst.msk [vmem:[#allocation7] sm:$0x3] %vm1388, %v1386
    // Predicated region
    $region46: #{lstm_model_forward.1} parent=1 // pred_check
      _
    $region47: #{lstm_model_forward.1} parent=1 // pred_check_branch
      %1391 = sbr.rel (0) target = $region49
    $region48: #{lstm_model_forward.1} parent=1 // pred_region
      %1393 = vsyncadd [#allocation4], 0
      %s1395 = sshll.u32 [#allocation7], 4
      %s1396 = int_to_ptr.vmem [resolvable:$true] %s1395
      %s1397 = sshll.u32 %s9, 4
      %s1398 = int_to_ptr.hbm [resolvable:$true] %s1397
      %1400 = dma.vmem_to_hbm [thread:$0]  %s1396, 32, %s1398, [#allocation4]
    $region49: #{lstm_model_forward.1} parent=1 // pred_fallthru
      _
    // Predicated region
    $region50: #{lstm_model_forward.1} parent=1 // pred_check
      _
    $region51: #{lstm_model_forward.1} parent=1 // pred_check_branch
      %1402 = sbr.rel (0) target = $region53
    $region52: #{lstm_model_forward.1} parent=1 // pred_region
      %1404 = dma.done [#allocation4], 32
    $region53: #{lstm_model_forward.1} parent=1 // pred_fallthru
      _
    %1405 = vsyncpa [#allocation3], 1
    %1406 = vsyncpa [#allocation6], 1
    %1407 = vsyncpa [#allocation4], 1

</llo_original>
